<compile_context>
chip_gen: v5e
topology: v5e:2x2
jax: 0.10.0
libtpu: 0.0.40
codegen_flags: <defaults>
</compile_context>

<pallas_src>
import functools

import jax
import jax.numpy as jnp
from jax import lax
from jax.experimental import pallas as pl
from jax.experimental.pallas import tpu as pltpu

K = 8          # number of bilinear factors (PyTorch default 20; small synthetic size)
HIDDEN = 32    # hidden_dim (PyTorch default 50; small synthetic size)


# --------------------------------------------------------------------------------------
# Fused kernel: per-batch bilinear attention features + GRU recurrence + per-position
# score.  One grid step processes PP paths (PP=1 -> aspect/opinion split across grid
# steps / TensorCores; PP=2 -> both paths in a single step).
# --------------------------------------------------------------------------------------
def _cmla_kernel(h_ref,                    # (B, T, H)            shared hidden states
                 v_ref,                    # (PP, B, H, 2K)       per-batch projected bilinear weights
                 fb_ref,                   # (PP, B, 2K)          per-batch projected bilinear biases
                 wi_ref, wh_ref,           # (PP, H2, 3*H2)       fused GRU gate weights [r|z|n]
                 bi_ref, bh_ref,           # (PP, 1, 3*H2)        GRU biases (input / hidden side)
                 mask_ref,                 # (B, T)               validity mask (t < length[b])
                 r_ref,                    # out: (PP, B, T, H2)
                 e_ref,                    # out: (PP, B, T)
                 *, B, T, H2, PP):
    f32 = jnp.float32
    h = h_ref[...]                                   # (B, T, H)
    mask = mask_ref[...][:, :, None]                 # (B, T, 1)

    for p in range(PP):
        V = v_ref[p]                                 # (B, H, H2)
        fb = fb_ref[p]                               # (B, H2)
        wi = wi_ref[p]                               # (H2, 3H2)
        wh = wh_ref[p]                               # (H2, 3H2)
        b_i = bi_ref[p]                              # (1, 3H2)
        b_h = bh_ref[p]                              # (1, 3H2)

        # ---- bilinear attention feature: f[b,t,:] = tanh(h[b,t,:] @ V[b] + fb[b]) -----
        f = jnp.tanh(
            jnp.einsum('bth,bhk->btk', h, V, preferred_element_type=f32)
            + fb[:, None, :])                        # (B, T, H2)

        # ---- GRU: input-side gate projections hoisted out of the recurrence (1 matmul)
        gi = (jnp.dot(f.reshape(B * T, H2), wi, preferred_element_type=f32)
              + b_i).reshape(B, T, 3 * H2)           # (B, T, 3H2), gates ordered [r|z|n]

        # ---- serial recurrence: one (B,H2)@(H2,3H2) matmul per step, state in vregs ---
        h_prev = jnp.zeros((B, H2), f32)
        hs = []
        for t in range(T):                           # T static -> fully unrolled
            gh = jnp.dot(h_prev, wh, preferred_element_type=f32) + b_h   # (B, 3H2)
            gi_t = gi[:, t, :]                                           # (B, 3H2)
            r_g = jax.nn.sigmoid(gi_t[:, :H2] + gh[:, :H2])
            z_g = jax.nn.sigmoid(gi_t[:, H2:2 * H2] + gh[:, H2:2 * H2])
            n_g = jnp.tanh(gi_t[:, 2 * H2:] + r_g * gh[:, 2 * H2:])
            h_prev = (1.0 - z_g) * n_g + z_g * h_prev
            hs.append(h_prev)

        # ---- pack/pad semantics: zero positions with t >= length[b] (prefix validity) -
        r_all = jnp.stack(hs, axis=1) * mask         # (B, T, H2), one stacked write below
        r_ref[p] = r_all
        # per-position score e[b,t] = <r[b,t,:], f[b,t,:]>
        e_ref[p] = jnp.sum(r_all * f, axis=-1)       # (B, T)


# --------------------------------------------------------------------------------------
# One-time parameter preparation (all transposes / gate packing hoisted off the call path)
# --------------------------------------------------------------------------------------
def prepare_params(p):
    H2 = 2 * K

    def bil3(w):  # torch Linear weight (K*H, H) -> (H_j, H_i, K) : W3[j,i,k] = W[k*H+j, i]
        return jnp.asarray(w).reshape(K, HIDDEN, HIDDEN).transpose(1, 2, 0)

    def b3(b):    # torch Linear bias (K*H,) -> (H_j, K) : b3[j,k] = b[k*H+j]
        return jnp.asarray(b).reshape(K, HIDDEN).T

    WG3 = jnp.stack([bil3(p["W_Ga"]), bil3(p["W_Gp"])])   # (2, H, H, K)
    WD3 = jnp.stack([bil3(p["W_Da"]), bil3(p["W_Dp"])])
    bG3 = jnp.stack([b3(p["b_Ga"]), b3(p["b_Gp"])])       # (2, H, K)
    bD3 = jnp.stack([b3(p["b_Da"]), b3(p["b_Dp"])])

    def gru_prep(g):
        WI = jnp.asarray(g["w_ih"]).T                     # (H2, 3H2), columns [r|z|n]
        WH = jnp.asarray(g["w_hh"]).T
        BI = jnp.asarray(g["b_ih"]).reshape(1, 3 * H2)
        BH = jnp.asarray(g["b_hh"]).reshape(1, 3 * H2)
        return WI, WH, BI, BH

    wia, wha, bia, bha = gru_prep(p["gru_ra"])
    wip, whp, bip, bhp = gru_prep(p["gru_rp"])
    return {"WG3": WG3, "WD3": WD3, "bG3": bG3, "bD3": bD3,
            "WI": jnp.stack([wia, wip]),                  # (2, H2, 3H2)
            "WH": jnp.stack([wha, whp]),                  # (2, H2, 3H2)
            "BI": jnp.stack([bia, bip]),                  # (2, 1, 3H2)
            "BH": jnp.stack([bha, bhp])}                  # (2, 1, 3H2)


def _default_paths_per_step():
    # 2 TensorCores per chip (v7x): one path per grid step + dimension_semantics="parallel"
    # splits the two paths across cores.  Single-TC chips (v5e/v6e): both paths in one grid
    # step to avoid per-step launch / weight-DMA overhead.  Both choices are correct.
    try:
        kind = jax.devices()[0].device_kind.lower()
    except Exception:
        return 2
    return 1 if "7" in kind else 2


# --------------------------------------------------------------------------------------
# Forward wrapper (single pallas_call)
# --------------------------------------------------------------------------------------
def cmla_forward(h, h_length, u_a, u_p, kp, paths_per_step=None):
    B, T, H = h.shape
    H2 = 2 * K
    PP = paths_per_step if paths_per_step is not None else _default_paths_per_step()
    n_steps = 2 // PP

    ua = u_a[:, :, 0]                                    # (B, H)
    up = u_p[:, :, 0]
    u1 = jnp.stack([ua, up])                             # (2, B, H)  "G"-side u per path
    u2 = jnp.stack([up, ua])                             # (2, B, H)  "D"-side u per path

    # Per-batch projected bilinear weights/biases (tiny einsums, once per call):
    #   V[p,b,i,k]  = sum_j W[p][k*H+j, i] * u_side[p,b,j]
    #   FB[p,b,k]   = sum_j b[p][k*H+j]    * u_side[p,b,j]
    Vg = jnp.einsum('pbj,pjik->pbik', u1, kp["WG3"])     # (2, B, H, K)
    Vd = jnp.einsum('pbj,pjik->pbik', u2, kp["WD3"])
    V = jnp.concatenate([Vg, Vd], axis=-1)               # (2, B, H, 2K)
    FB = jnp.concatenate([jnp.einsum('pbj,pjk->pbk', u1, kp["bG3"]),
                          jnp.einsum('pbj,pjk->pbk', u2, kp["bD3"])], axis=-1)  # (2, B, 2K)

    mask = (jnp.arange(T, dtype=jnp.int32)[None, :]
            < h_length.astype(jnp.int32)[:, None]).astype(jnp.float32)          # (B, T)

    kern = functools.partial(_cmla_kernel, B=B, T=T, H2=H2, PP=PP)

    r_out, e_out = pl.pallas_call(
        kern,
        grid=(n_steps,),
        in_specs=[
            pl.BlockSpec((B, T, H), lambda i: (0, 0, 0)),            # h (shared)
            pl.BlockSpec((PP, B, H, H2), lambda i: (i, 0, 0, 0)),    # V
            pl.BlockSpec((PP, B, H2), lambda i: (i, 0, 0)),          # FB
            pl.BlockSpec((PP, H2, 3 * H2), lambda i: (i, 0, 0)),     # WI
            pl.BlockSpec((PP, H2, 3 * H2), lambda i: (i, 0, 0)),     # WH
            pl.BlockSpec((PP, 1, 3 * H2), lambda i: (i, 0, 0)),      # BI
            pl.BlockSpec((PP, 1, 3 * H2), lambda i: (i, 0, 0)),      # BH
            pl.BlockSpec((B, T), lambda i: (0, 0)),                  # mask (shared)
        ],
        out_specs=(
            pl.BlockSpec((PP, B, T, H2), lambda i: (i, 0, 0, 0)),    # r
            pl.BlockSpec((PP, B, T), lambda i: (i, 0, 0)),           # e
        ),
        out_shape=(jax.ShapeDtypeStruct((2, B, T, H2), jnp.float32),
                   jax.ShapeDtypeStruct((2, B, T), jnp.float32)),
        compiler_params=pltpu.CompilerParams(dimension_semantics=("parallel",)),
    )(h.astype(jnp.float32), V, FB, kp["WI"], kp["WH"], kp["BI"], kp["BH"], mask)

    return (r_out[0], r_out[1]), (e_out[0], e_out[1])


# --------------------------------------------------------------------------------------
# Pure-JAX reference (numerical validation only; follows torch pack/pad semantics)
# --------------------------------------------------------------------------------------
def reference_forward(h, h_length, u_a, u_p, p):
    b_s, d_s, H = h.shape
    ua = u_a[:, :, 0]
    up = u_p[:, :, 0]

    def bil(W, b, u):
        proj = (jnp.einsum("bti,oi->bto", h, W) + b).reshape(b_s, d_s, K, H)
        return jnp.einsum("btkj,bj->btk", proj, u)

    fa = jnp.tanh(jnp.concatenate([bil(p["W_Ga"], p["b_Ga"], ua),
                                   bil(p["W_Da"], p["b_Da"], up)], axis=-1))
    fp = jnp.tanh(jnp.concatenate([bil(p["W_Gp"], p["b_Gp"], up),
                                   bil(p["W_Dp"], p["b_Dp"], ua)], axis=-1))

    def gru(x, g):
        B, T, H2 = x.shape
        Wih, Whh, bih, bhh = g["w_ih"], g["w_hh"], g["b_ih"], g["b_hh"]

        def step(h_prev, inp):
            x_t, t = inp
            gi = x_t @ Wih.T + bih
            gh = h_prev @ Whh.T + bhh
            r = jax.nn.sigmoid(gi[:, :H2] + gh[:, :H2])
            z = jax.nn.sigmoid(gi[:, H2:2 * H2] + gh[:, H2:2 * H2])
            n = jnp.tanh(gi[:, 2 * H2:] + r * gh[:, 2 * H2:])
            h_new = (1.0 - z) * n + z * h_prev
            valid = (t < h_length)[:, None]
            return jnp.where(valid, h_new, h_prev), jnp.where(valid, h_new, 0.0)

        _, outs = lax.scan(step, jnp.zeros((B, H2), jnp.float32),
                           (jnp.swapaxes(x, 0, 1), jnp.arange(T)))
        return jnp.swapaxes(outs, 0, 1)

    ra = gru(fa, p["gru_ra"])
    rp = gru(fp, p["gru_rp"])
    ea = jnp.sum(ra * fa, axis=-1)
    ep = jnp.sum(rp * fp, axis=-1)
    return (ra, rp), (ea, ep)


# --------------------------------------------------------------------------------------
# Deterministic parameter init (shapes match the nn.Module __init__)
# --------------------------------------------------------------------------------------
def init_params(key):
    ks = iter(jax.random.split(key, 24))
    sc = 0.1

    def lin(out_f, in_f):
        return (jax.random.normal(next(ks), (out_f, in_f), jnp.float32) * sc,
                jax.random.normal(next(ks), (out_f,), jnp.float32) * sc)

    def gru_p(h2):
        return {"w_ih": jax.random.normal(next(ks), (3 * h2, h2), jnp.float32) * sc,
                "w_hh": jax.random.normal(next(ks), (3 * h2, h2), jnp.float32) * sc,
                "b_ih": jax.random.normal(next(ks), (3 * h2,), jnp.float32) * sc,
                "b_hh": jax.random.normal(next(ks), (3 * h2,), jnp.float32) * sc}

    W_Ga, b_Ga = lin(K * HIDDEN, HIDDEN)
    W_Gp, b_Gp = lin(K * HIDDEN, HIDDEN)
    W_Da, b_Da = lin(K * HIDDEN, HIDDEN)
    W_Dp, b_Dp = lin(K * HIDDEN, HIDDEN)
    return {"W_Ga": W_Ga, "b_Ga": b_Ga, "W_Gp": W_Gp, "b_Gp": b_Gp,
            "W_Da": W_Da, "b_Da": b_Da, "W_Dp": W_Dp, "b_Dp": b_Dp,
            "gru_ra": gru_p(2 * K), "gru_rp": gru_p(2 * K)}


if __name__ == "__main__":
    b_s, d_s = 2, 8

    key = jax.random.PRNGKey(0)
    k_par, k_h, k_ua, k_up = jax.random.split(key, 4)
    params = init_params(k_par)
    kparams = prepare_params(params)          # one-time weight layout prep

    h = jax.random.normal(k_h, (b_s, d_s, HIDDEN), jnp.float32)
    u_a = jax.random.normal(k_ua, (b_s, HIDDEN, 1), jnp.float32)
    u_p = jax.random.normal(k_up, (b_s, HIDDEN, 1), jnp.float32)
    # pack_padded_sequence(enforce_sorted=True) requires descending lengths
    h_length = jnp.array([d_s, d_s - 2], dtype=jnp.int32)

    (ra_r, rp_r), (ea_r, ep_r) = reference_forward(h, h_length, u_a, u_p, params)

    # Exercise both grid configurations: collapsed single step (v5e/v6e) and the
    # two-step parallel grid (v7x megacore).  The default picks one of these.
    for pp in (2, 1):
        fwd = jax.jit(functools.partial(cmla_forward, paths_per_step=pp))
        (ra, rp), (ea, ep) = fwd(h, h_length, u_a, u_p, kparams)
        jax.block_until_ready((ra, rp, ea, ep))
        for got, want in [(ra, ra_r), (rp, rp_r), (ea, ea_r), (ep, ep_r)]:
            assert got.shape == want.shape, (got.shape, want.shape)
            assert jnp.allclose(got, want, atol=2e-2, rtol=2e-2), \
                float(jnp.max(jnp.abs(got - want)))

    print("KERNEL_OK")
</pallas_src>

<mosaic_0001>
module attributes {stable_mosaic.version = 11 : i64} {
  func.func @_cmla_kernel(%arg0: i32, %arg1: memref<2x8x32xf32, #tpu.memory_space<vmem>>, %arg2: memref<2x2x32x16xf32, #tpu.memory_space<vmem>>, %arg3: memref<2x2x16xf32, #tpu.memory_space<vmem>>, %arg4: memref<2x16x48xf32, #tpu.memory_space<vmem>>, %arg5: memref<2x16x48xf32, #tpu.memory_space<vmem>>, %arg6: memref<2x1x48xf32, #tpu.memory_space<vmem>>, %arg7: memref<2x1x48xf32, #tpu.memory_space<vmem>>, %arg8: memref<2x8xf32, #tpu.memory_space<vmem>>, %arg9: memref<2x2x8x16xf32, #tpu.memory_space<vmem>>, %arg10: memref<2x2x8xf32, #tpu.memory_space<vmem>>) attributes {dimension_semantics = [#tpu.dimension_semantics<parallel>], iteration_bounds = array<i64: 1>, scalar_prefetch = 0 : i64, scratch_operands = 0 : i64, tpu.core_type = #tpu.core_type<tc>, window_params = [{pipeline_mode = #tpu.pipeline_mode<synchronous>, transform_indices = @transform_0, window_bounds = array<i64: 2, 8, 32>}, {transform_indices = @transform_1, window_bounds = array<i64: 2, 2, 32, 16>}, {transform_indices = @transform_2, window_bounds = array<i64: 2, 2, 16>}, {transform_indices = @transform_3, window_bounds = array<i64: 2, 16, 48>}, {transform_indices = @transform_4, window_bounds = array<i64: 2, 16, 48>}, {transform_indices = @transform_5, window_bounds = array<i64: 2, 1, 48>}, {transform_indices = @transform_6, window_bounds = array<i64: 2, 1, 48>}, {pipeline_mode = #tpu.pipeline_mode<synchronous>, transform_indices = @transform_7, window_bounds = array<i64: 2, 8>}, {transform_indices = @transform_8, window_bounds = array<i64: 2, 2, 8, 16>}, {transform_indices = @transform_9, window_bounds = array<i64: 2, 2, 8>}]} {
    %c0 = arith.constant 0 : index
    %c0_0 = arith.constant 0 : index
    %c0_1 = arith.constant 0 : index
    %0 = vector.load %arg1[%c0, %c0_0, %c0_1] : memref<2x8x32xf32, #tpu.memory_space<vmem>>, vector<2x8x32xf32>
    %c0_2 = arith.constant 0 : index
    %c0_3 = arith.constant 0 : index
    %1 = vector.load %arg8[%c0_2, %c0_3] : memref<2x8xf32, #tpu.memory_space<vmem>>, vector<2x8xf32>
    %2 = vector.shape_cast %1 : vector<2x8xf32> to vector<2x8x1xf32>
    %c0_4 = arith.constant 0 : index
    %c0_5 = arith.constant 0 : index
    %c0_6 = arith.constant 0 : index
    %c0_7 = arith.constant 0 : index
    %3 = vector.load %arg2[%c0_4, %c0_5, %c0_6, %c0_7] : memref<2x2x32x16xf32, #tpu.memory_space<vmem>>, vector<1x2x32x16xf32>
    %4 = vector.shape_cast %3 : vector<1x2x32x16xf32> to vector<2x32x16xf32>
    %c0_8 = arith.constant 0 : index
    %c0_9 = arith.constant 0 : index
    %c0_10 = arith.constant 0 : index
    %5 = vector.load %arg3[%c0_8, %c0_9, %c0_10] : memref<2x2x16xf32, #tpu.memory_space<vmem>>, vector<1x2x16xf32>
    %6 = vector.shape_cast %5 : vector<1x2x16xf32> to vector<2x16xf32>
    %c0_11 = arith.constant 0 : index
    %c0_12 = arith.constant 0 : index
    %c0_13 = arith.constant 0 : index
    %7 = vector.load %arg4[%c0_11, %c0_12, %c0_13] : memref<2x16x48xf32, #tpu.memory_space<vmem>>, vector<1x16x48xf32>
    %8 = vector.shape_cast %7 : vector<1x16x48xf32> to vector<16x48xf32>
    %c0_14 = arith.constant 0 : index
    %c0_15 = arith.constant 0 : index
    %c0_16 = arith.constant 0 : index
    %9 = vector.load %arg5[%c0_14, %c0_15, %c0_16] : memref<2x16x48xf32, #tpu.memory_space<vmem>>, vector<1x16x48xf32>
    %10 = vector.shape_cast %9 : vector<1x16x48xf32> to vector<16x48xf32>
    %c0_17 = arith.constant 0 : index
    %c0_18 = arith.constant 0 : index
    %c0_19 = arith.constant 0 : index
    %11 = vector.load %arg6[%c0_17, %c0_18, %c0_19] : memref<2x1x48xf32, #tpu.memory_space<vmem>>, vector<1x1x48xf32>
    %12 = vector.shape_cast %11 : vector<1x1x48xf32> to vector<1x48xf32>
    %c0_20 = arith.constant 0 : index
    %c0_21 = arith.constant 0 : index
    %c0_22 = arith.constant 0 : index
    %13 = vector.load %arg7[%c0_20, %c0_21, %c0_22] : memref<2x1x48xf32, #tpu.memory_space<vmem>>, vector<1x1x48xf32>
    %14 = vector.shape_cast %13 : vector<1x1x48xf32> to vector<1x48xf32>
    "tpu.trace_start"() <{level = 10 : i32, message = "bth,bhk->btk"}> : () -> ()
    %cst = arith.constant dense<0.000000e+00> : vector<2x8x16xf32>
    %15 = tpu.matmul %0, %4, %cst {dimension_numbers = #tpu.dot_dimension_numbers<[2], [1], [1], [2], [0, 0, 0, 1, 1, 2], [0], [0]>} : vector<2x8x32xf32>, vector<2x32x16xf32>, vector<2x8x16xf32> -> vector<2x8x16xf32>
    "tpu.trace_stop"() : () -> ()
    %16 = vector.shape_cast %6 : vector<2x16xf32> to vector<2x1x16xf32>
    %17 = vector.broadcast %16 : vector<2x1x16xf32> to vector<2x8x16xf32>
    %18 = arith.addf %15, %17 : vector<2x8x16xf32>
    %19 = math.tanh %18 : vector<2x8x16xf32>
    %20 = vector.shape_cast %19 : vector<2x8x16xf32> to vector<16x16xf32>
    %cst_23 = arith.constant dense<0.000000e+00> : vector<16x48xf32>
    %21 = tpu.matmul %20, %8, %cst_23 {dimension_numbers = #tpu.dot_dimension_numbers<[1], [0], [0], [1], [0, 0, 1, 1], [], []>} : vector<16x16xf32>, vector<16x48xf32>, vector<16x48xf32> -> vector<16x48xf32>
    %22 = vector.broadcast %12 : vector<1x48xf32> to vector<16x48xf32>
    %23 = arith.addf %21, %22 : vector<16x48xf32>
    %24 = vector.shape_cast %23 : vector<16x48xf32> to vector<2x8x48xf32>
    %cst_24 = arith.constant 0.000000e+00 : f32
    %25 = vector.broadcast %cst_24 : f32 to vector<2x16xf32>
    %cst_25 = arith.constant dense<0.000000e+00> : vector<2x48xf32>
    %26 = tpu.matmul %25, %10, %cst_25 {dimension_numbers = #tpu.dot_dimension_numbers<[1], [0], [0], [1], [0, 0, 1, 1], [], []>} : vector<2x16xf32>, vector<16x48xf32>, vector<2x48xf32> -> vector<2x48xf32>
    %27 = vector.broadcast %14 : vector<1x48xf32> to vector<2x48xf32>
    %28 = arith.addf %26, %27 : vector<2x48xf32>
    %29 = vector.extract_strided_slice %24 {offsets = [0, 0, 0], sizes = [2, 1, 48], strides = [1, 1, 1]} : vector<2x8x48xf32> to vector<2x1x48xf32>
    %30 = vector.shape_cast %29 : vector<2x1x48xf32> to vector<2x48xf32>
    %31 = vector.extract_strided_slice %30 {offsets = [0, 0], sizes = [2, 16], strides = [1, 1]} : vector<2x48xf32> to vector<2x16xf32>
    %32 = vector.extract_strided_slice %28 {offsets = [0, 0], sizes = [2, 16], strides = [1, 1]} : vector<2x48xf32> to vector<2x16xf32>
    %33 = arith.addf %31, %32 : vector<2x16xf32>
    %34 = arith.negf %33 : vector<2x16xf32>
    %35 = math.exp %34 : vector<2x16xf32>
    %cst_26 = arith.constant 1.000000e+00 : f32
    %36 = vector.broadcast %cst_26 : f32 to vector<2x16xf32>
    %37 = arith.addf %36, %35 : vector<2x16xf32>
    %38 = arith.divf %36, %37 : vector<2x16xf32>
    %39 = vector.extract_strided_slice %30 {offsets = [0, 16], sizes = [2, 16], strides = [1, 1]} : vector<2x48xf32> to vector<2x16xf32>
    %40 = vector.extract_strided_slice %28 {offsets = [0, 16], sizes = [2, 16], strides = [1, 1]} : vector<2x48xf32> to vector<2x16xf32>
    %41 = arith.addf %39, %40 : vector<2x16xf32>
    %42 = arith.negf %41 : vector<2x16xf32>
    %43 = math.exp %42 : vector<2x16xf32>
    %cst_27 = arith.constant 1.000000e+00 : f32
    %44 = vector.broadcast %cst_27 : f32 to vector<2x16xf32>
    %45 = arith.addf %44, %43 : vector<2x16xf32>
    %46 = arith.divf %44, %45 : vector<2x16xf32>
    %47 = vector.extract_strided_slice %30 {offsets = [0, 32], sizes = [2, 16], strides = [1, 1]} : vector<2x48xf32> to vector<2x16xf32>
    %48 = vector.extract_strided_slice %28 {offsets = [0, 32], sizes = [2, 16], strides = [1, 1]} : vector<2x48xf32> to vector<2x16xf32>
    %49 = arith.mulf %38, %48 : vector<2x16xf32>
    %50 = arith.addf %47, %49 : vector<2x16xf32>
    %51 = math.tanh %50 : vector<2x16xf32>
    %cst_28 = arith.constant 1.000000e+00 : f32
    %52 = vector.broadcast %cst_28 : f32 to vector<2x16xf32>
    %53 = arith.subf %52, %46 : vector<2x16xf32>
    %54 = arith.mulf %53, %51 : vector<2x16xf32>
    %55 = arith.mulf %46, %25 : vector<2x16xf32>
    %56 = arith.addf %54, %55 : vector<2x16xf32>
    %cst_29 = arith.constant dense<0.000000e+00> : vector<2x48xf32>
    %57 = tpu.matmul %56, %10, %cst_29 {dimension_numbers = #tpu.dot_dimension_numbers<[1], [0], [0], [1], [0, 0, 1, 1], [], []>} : vector<2x16xf32>, vector<16x48xf32>, vector<2x48xf32> -> vector<2x48xf32>
    %58 = vector.broadcast %14 : vector<1x48xf32> to vector<2x48xf32>
    %59 = arith.addf %57, %58 : vector<2x48xf32>
    %60 = vector.extract_strided_slice %24 {offsets = [0, 1, 0], sizes = [2, 1, 48], strides = [1, 1, 1]} : vector<2x8x48xf32> to vector<2x1x48xf32>
    %61 = vector.shape_cast %60 : vector<2x1x48xf32> to vector<2x48xf32>
    %62 = vector.extract_strided_slice %61 {offsets = [0, 0], sizes = [2, 16], strides = [1, 1]} : vector<2x48xf32> to vector<2x16xf32>
    %63 = vector.extract_strided_slice %59 {offsets = [0, 0], sizes = [2, 16], strides = [1, 1]} : vector<2x48xf32> to vector<2x16xf32>
    %64 = arith.addf %62, %63 : vector<2x16xf32>
    %65 = arith.negf %64 : vector<2x16xf32>
    %66 = math.exp %65 : vector<2x16xf32>
    %cst_30 = arith.constant 1.000000e+00 : f32
    %67 = vector.broadcast %cst_30 : f32 to vector<2x16xf32>
    %68 = arith.addf %67, %66 : vector<2x16xf32>
    %69 = arith.divf %67, %68 : vector<2x16xf32>
    %70 = vector.extract_strided_slice %61 {offsets = [0, 16], sizes = [2, 16], strides = [1, 1]} : vector<2x48xf32> to vector<2x16xf32>
    %71 = vector.extract_strided_slice %59 {offsets = [0, 16], sizes = [2, 16], strides = [1, 1]} : vector<2x48xf32> to vector<2x16xf32>
    %72 = arith.addf %70, %71 : vector<2x16xf32>
    %73 = arith.negf %72 : vector<2x16xf32>
    %74 = math.exp %73 : vector<2x16xf32>
    %cst_31 = arith.constant 1.000000e+00 : f32
    %75 = vector.broadcast %cst_31 : f32 to vector<2x16xf32>
    %76 = arith.addf %75, %74 : vector<2x16xf32>
    %77 = arith.divf %75, %76 : vector<2x16xf32>
    %78 = vector.extract_strided_slice %61 {offsets = [0, 32], sizes = [2, 16], strides = [1, 1]} : vector<2x48xf32> to vector<2x16xf32>
    %79 = vector.extract_strided_slice %59 {offsets = [0, 32], sizes = [2, 16], strides = [1, 1]} : vector<2x48xf32> to vector<2x16xf32>
    %80 = arith.mulf %69, %79 : vector<2x16xf32>
    %81 = arith.addf %78, %80 : vector<2x16xf32>
    %82 = math.tanh %81 : vector<2x16xf32>
    %cst_32 = arith.constant 1.000000e+00 : f32
    %83 = vector.broadcast %cst_32 : f32 to vector<2x16xf32>
    %84 = arith.subf %83, %77 : vector<2x16xf32>
    %85 = arith.mulf %84, %82 : vector<2x16xf32>
    %86 = arith.mulf %77, %56 : vector<2x16xf32>
    %87 = arith.addf %85, %86 : vector<2x16xf32>
    %cst_33 = arith.constant dense<0.000000e+00> : vector<2x48xf32>
    %88 = tpu.matmul %87, %10, %cst_33 {dimension_numbers = #tpu.dot_dimension_numbers<[1], [0], [0], [1], [0, 0, 1, 1], [], []>} : vector<2x16xf32>, vector<16x48xf32>, vector<2x48xf32> -> vector<2x48xf32>
    %89 = vector.broadcast %14 : vector<1x48xf32> to vector<2x48xf32>
    %90 = arith.addf %88, %89 : vector<2x48xf32>
    %91 = vector.extract_strided_slice %24 {offsets = [0, 2, 0], sizes = [2, 1, 48], strides = [1, 1, 1]} : vector<2x8x48xf32> to vector<2x1x48xf32>
    %92 = vector.shape_cast %91 : vector<2x1x48xf32> to vector<2x48xf32>
    %93 = vector.extract_strided_slice %92 {offsets = [0, 0], sizes = [2, 16], strides = [1, 1]} : vector<2x48xf32> to vector<2x16xf32>
    %94 = vector.extract_strided_slice %90 {offsets = [0, 0], sizes = [2, 16], strides = [1, 1]} : vector<2x48xf32> to vector<2x16xf32>
    %95 = arith.addf %93, %94 : vector<2x16xf32>
    %96 = arith.negf %95 : vector<2x16xf32>
    %97 = math.exp %96 : vector<2x16xf32>
    %cst_34 = arith.constant 1.000000e+00 : f32
    %98 = vector.broadcast %cst_34 : f32 to vector<2x16xf32>
    %99 = arith.addf %98, %97 : vector<2x16xf32>
    %100 = arith.divf %98, %99 : vector<2x16xf32>
    %101 = vector.extract_strided_slice %92 {offsets = [0, 16], sizes = [2, 16], strides = [1, 1]} : vector<2x48xf32> to vector<2x16xf32>
    %102 = vector.extract_strided_slice %90 {offsets = [0, 16], sizes = [2, 16], strides = [1, 1]} : vector<2x48xf32> to vector<2x16xf32>
    %103 = arith.addf %101, %102 : vector<2x16xf32>
    %104 = arith.negf %103 : vector<2x16xf32>
    %105 = math.exp %104 : vector<2x16xf32>
    %cst_35 = arith.constant 1.000000e+00 : f32
    %106 = vector.broadcast %cst_35 : f32 to vector<2x16xf32>
    %107 = arith.addf %106, %105 : vector<2x16xf32>
    %108 = arith.divf %106, %107 : vector<2x16xf32>
    %109 = vector.extract_strided_slice %92 {offsets = [0, 32], sizes = [2, 16], strides = [1, 1]} : vector<2x48xf32> to vector<2x16xf32>
    %110 = vector.extract_strided_slice %90 {offsets = [0, 32], sizes = [2, 16], strides = [1, 1]} : vector<2x48xf32> to vector<2x16xf32>
    %111 = arith.mulf %100, %110 : vector<2x16xf32>
    %112 = arith.addf %109, %111 : vector<2x16xf32>
    %113 = math.tanh %112 : vector<2x16xf32>
    %cst_36 = arith.constant 1.000000e+00 : f32
    %114 = vector.broadcast %cst_36 : f32 to vector<2x16xf32>
    %115 = arith.subf %114, %108 : vector<2x16xf32>
    %116 = arith.mulf %115, %113 : vector<2x16xf32>
    %117 = arith.mulf %108, %87 : vector<2x16xf32>
    %118 = arith.addf %116, %117 : vector<2x16xf32>
    %cst_37 = arith.constant dense<0.000000e+00> : vector<2x48xf32>
    %119 = tpu.matmul %118, %10, %cst_37 {dimension_numbers = #tpu.dot_dimension_numbers<[1], [0], [0], [1], [0, 0, 1, 1], [], []>} : vector<2x16xf32>, vector<16x48xf32>, vector<2x48xf32> -> vector<2x48xf32>
    %120 = vector.broadcast %14 : vector<1x48xf32> to vector<2x48xf32>
    %121 = arith.addf %119, %120 : vector<2x48xf32>
    %122 = vector.extract_strided_slice %24 {offsets = [0, 3, 0], sizes = [2, 1, 48], strides = [1, 1, 1]} : vector<2x8x48xf32> to vector<2x1x48xf32>
    %123 = vector.shape_cast %122 : vector<2x1x48xf32> to vector<2x48xf32>
    %124 = vector.extract_strided_slice %123 {offsets = [0, 0], sizes = [2, 16], strides = [1, 1]} : vector<2x48xf32> to vector<2x16xf32>
    %125 = vector.extract_strided_slice %121 {offsets = [0, 0], sizes = [2, 16], strides = [1, 1]} : vector<2x48xf32> to vector<2x16xf32>
    %126 = arith.addf %124, %125 : vector<2x16xf32>
    %127 = arith.negf %126 : vector<2x16xf32>
    %128 = math.exp %127 : vector<2x16xf32>
    %cst_38 = arith.constant 1.000000e+00 : f32
    %129 = vector.broadcast %cst_38 : f32 to vector<2x16xf32>
    %130 = arith.addf %129, %128 : vector<2x16xf32>
    %131 = arith.divf %129, %130 : vector<2x16xf32>
    %132 = vector.extract_strided_slice %123 {offsets = [0, 16], sizes = [2, 16], strides = [1, 1]} : vector<2x48xf32> to vector<2x16xf32>
    %133 = vector.extract_strided_slice %121 {offsets = [0, 16], sizes = [2, 16], strides = [1, 1]} : vector<2x48xf32> to vector<2x16xf32>
    %134 = arith.addf %132, %133 : vector<2x16xf32>
    %135 = arith.negf %134 : vector<2x16xf32>
    %136 = math.exp %135 : vector<2x16xf32>
    %cst_39 = arith.constant 1.000000e+00 : f32
    %137 = vector.broadcast %cst_39 : f32 to vector<2x16xf32>
    %138 = arith.addf %137, %136 : vector<2x16xf32>
    %139 = arith.divf %137, %138 : vector<2x16xf32>
    %140 = vector.extract_strided_slice %123 {offsets = [0, 32], sizes = [2, 16], strides = [1, 1]} : vector<2x48xf32> to vector<2x16xf32>
    %141 = vector.extract_strided_slice %121 {offsets = [0, 32], sizes = [2, 16], strides = [1, 1]} : vector<2x48xf32> to vector<2x16xf32>
    %142 = arith.mulf %131, %141 : vector<2x16xf32>
    %143 = arith.addf %140, %142 : vector<2x16xf32>
    %144 = math.tanh %143 : vector<2x16xf32>
    %cst_40 = arith.constant 1.000000e+00 : f32
    %145 = vector.broadcast %cst_40 : f32 to vector<2x16xf32>
    %146 = arith.subf %145, %139 : vector<2x16xf32>
    %147 = arith.mulf %146, %144 : vector<2x16xf32>
    %148 = arith.mulf %139, %118 : vector<2x16xf32>
    %149 = arith.addf %147, %148 : vector<2x16xf32>
    %cst_41 = arith.constant dense<0.000000e+00> : vector<2x48xf32>
    %150 = tpu.matmul %149, %10, %cst_41 {dimension_numbers = #tpu.dot_dimension_numbers<[1], [0], [0], [1], [0, 0, 1, 1], [], []>} : vector<2x16xf32>, vector<16x48xf32>, vector<2x48xf32> -> vector<2x48xf32>
    %151 = vector.broadcast %14 : vector<1x48xf32> to vector<2x48xf32>
    %152 = arith.addf %150, %151 : vector<2x48xf32>
    %153 = vector.extract_strided_slice %24 {offsets = [0, 4, 0], sizes = [2, 1, 48], strides = [1, 1, 1]} : vector<2x8x48xf32> to vector<2x1x48xf32>
    %154 = vector.shape_cast %153 : vector<2x1x48xf32> to vector<2x48xf32>
    %155 = vector.extract_strided_slice %154 {offsets = [0, 0], sizes = [2, 16], strides = [1, 1]} : vector<2x48xf32> to vector<2x16xf32>
    %156 = vector.extract_strided_slice %152 {offsets = [0, 0], sizes = [2, 16], strides = [1, 1]} : vector<2x48xf32> to vector<2x16xf32>
    %157 = arith.addf %155, %156 : vector<2x16xf32>
    %158 = arith.negf %157 : vector<2x16xf32>
    %159 = math.exp %158 : vector<2x16xf32>
    %cst_42 = arith.constant 1.000000e+00 : f32
    %160 = vector.broadcast %cst_42 : f32 to vector<2x16xf32>
    %161 = arith.addf %160, %159 : vector<2x16xf32>
    %162 = arith.divf %160, %161 : vector<2x16xf32>
    %163 = vector.extract_strided_slice %154 {offsets = [0, 16], sizes = [2, 16], strides = [1, 1]} : vector<2x48xf32> to vector<2x16xf32>
    %164 = vector.extract_strided_slice %152 {offsets = [0, 16], sizes = [2, 16], strides = [1, 1]} : vector<2x48xf32> to vector<2x16xf32>
    %165 = arith.addf %163, %164 : vector<2x16xf32>
    %166 = arith.negf %165 : vector<2x16xf32>
    %167 = math.exp %166 : vector<2x16xf32>
    %cst_43 = arith.constant 1.000000e+00 : f32
    %168 = vector.broadcast %cst_43 : f32 to vector<2x16xf32>
    %169 = arith.addf %168, %167 : vector<2x16xf32>
    %170 = arith.divf %168, %169 : vector<2x16xf32>
    %171 = vector.extract_strided_slice %154 {offsets = [0, 32], sizes = [2, 16], strides = [1, 1]} : vector<2x48xf32> to vector<2x16xf32>
    %172 = vector.extract_strided_slice %152 {offsets = [0, 32], sizes = [2, 16], strides = [1, 1]} : vector<2x48xf32> to vector<2x16xf32>
    %173 = arith.mulf %162, %172 : vector<2x16xf32>
    %174 = arith.addf %171, %173 : vector<2x16xf32>
    %175 = math.tanh %174 : vector<2x16xf32>
    %cst_44 = arith.constant 1.000000e+00 : f32
    %176 = vector.broadcast %cst_44 : f32 to vector<2x16xf32>
    %177 = arith.subf %176, %170 : vector<2x16xf32>
    %178 = arith.mulf %177, %175 : vector<2x16xf32>
    %179 = arith.mulf %170, %149 : vector<2x16xf32>
    %180 = arith.addf %178, %179 : vector<2x16xf32>
    %cst_45 = arith.constant dense<0.000000e+00> : vector<2x48xf32>
    %181 = tpu.matmul %180, %10, %cst_45 {dimension_numbers = #tpu.dot_dimension_numbers<[1], [0], [0], [1], [0, 0, 1, 1], [], []>} : vector<2x16xf32>, vector<16x48xf32>, vector<2x48xf32> -> vector<2x48xf32>
    %182 = vector.broadcast %14 : vector<1x48xf32> to vector<2x48xf32>
    %183 = arith.addf %181, %182 : vector<2x48xf32>
    %184 = vector.extract_strided_slice %24 {offsets = [0, 5, 0], sizes = [2, 1, 48], strides = [1, 1, 1]} : vector<2x8x48xf32> to vector<2x1x48xf32>
    %185 = vector.shape_cast %184 : vector<2x1x48xf32> to vector<2x48xf32>
    %186 = vector.extract_strided_slice %185 {offsets = [0, 0], sizes = [2, 16], strides = [1, 1]} : vector<2x48xf32> to vector<2x16xf32>
    %187 = vector.extract_strided_slice %183 {offsets = [0, 0], sizes = [2, 16], strides = [1, 1]} : vector<2x48xf32> to vector<2x16xf32>
    %188 = arith.addf %186, %187 : vector<2x16xf32>
    %189 = arith.negf %188 : vector<2x16xf32>
    %190 = math.exp %189 : vector<2x16xf32>
    %cst_46 = arith.constant 1.000000e+00 : f32
    %191 = vector.broadcast %cst_46 : f32 to vector<2x16xf32>
    %192 = arith.addf %191, %190 : vector<2x16xf32>
    %193 = arith.divf %191, %192 : vector<2x16xf32>
    %194 = vector.extract_strided_slice %185 {offsets = [0, 16], sizes = [2, 16], strides = [1, 1]} : vector<2x48xf32> to vector<2x16xf32>
    %195 = vector.extract_strided_slice %183 {offsets = [0, 16], sizes = [2, 16], strides = [1, 1]} : vector<2x48xf32> to vector<2x16xf32>
    %196 = arith.addf %194, %195 : vector<2x16xf32>
    %197 = arith.negf %196 : vector<2x16xf32>
    %198 = math.exp %197 : vector<2x16xf32>
    %cst_47 = arith.constant 1.000000e+00 : f32
    %199 = vector.broadcast %cst_47 : f32 to vector<2x16xf32>
    %200 = arith.addf %199, %198 : vector<2x16xf32>
    %201 = arith.divf %199, %200 : vector<2x16xf32>
    %202 = vector.extract_strided_slice %185 {offsets = [0, 32], sizes = [2, 16], strides = [1, 1]} : vector<2x48xf32> to vector<2x16xf32>
    %203 = vector.extract_strided_slice %183 {offsets = [0, 32], sizes = [2, 16], strides = [1, 1]} : vector<2x48xf32> to vector<2x16xf32>
    %204 = arith.mulf %193, %203 : vector<2x16xf32>
    %205 = arith.addf %202, %204 : vector<2x16xf32>
    %206 = math.tanh %205 : vector<2x16xf32>
    %cst_48 = arith.constant 1.000000e+00 : f32
    %207 = vector.broadcast %cst_48 : f32 to vector<2x16xf32>
    %208 = arith.subf %207, %201 : vector<2x16xf32>
    %209 = arith.mulf %208, %206 : vector<2x16xf32>
    %210 = arith.mulf %201, %180 : vector<2x16xf32>
    %211 = arith.addf %209, %210 : vector<2x16xf32>
    %cst_49 = arith.constant dense<0.000000e+00> : vector<2x48xf32>
    %212 = tpu.matmul %211, %10, %cst_49 {dimension_numbers = #tpu.dot_dimension_numbers<[1], [0], [0], [1], [0, 0, 1, 1], [], []>} : vector<2x16xf32>, vector<16x48xf32>, vector<2x48xf32> -> vector<2x48xf32>
    %213 = vector.broadcast %14 : vector<1x48xf32> to vector<2x48xf32>
    %214 = arith.addf %212, %213 : vector<2x48xf32>
    %215 = vector.extract_strided_slice %24 {offsets = [0, 6, 0], sizes = [2, 1, 48], strides = [1, 1, 1]} : vector<2x8x48xf32> to vector<2x1x48xf32>
    %216 = vector.shape_cast %215 : vector<2x1x48xf32> to vector<2x48xf32>
    %217 = vector.extract_strided_slice %216 {offsets = [0, 0], sizes = [2, 16], strides = [1, 1]} : vector<2x48xf32> to vector<2x16xf32>
    %218 = vector.extract_strided_slice %214 {offsets = [0, 0], sizes = [2, 16], strides = [1, 1]} : vector<2x48xf32> to vector<2x16xf32>
    %219 = arith.addf %217, %218 : vector<2x16xf32>
    %220 = arith.negf %219 : vector<2x16xf32>
    %221 = math.exp %220 : vector<2x16xf32>
    %cst_50 = arith.constant 1.000000e+00 : f32
    %222 = vector.broadcast %cst_50 : f32 to vector<2x16xf32>
    %223 = arith.addf %222, %221 : vector<2x16xf32>
    %224 = arith.divf %222, %223 : vector<2x16xf32>
    %225 = vector.extract_strided_slice %216 {offsets = [0, 16], sizes = [2, 16], strides = [1, 1]} : vector<2x48xf32> to vector<2x16xf32>
    %226 = vector.extract_strided_slice %214 {offsets = [0, 16], sizes = [2, 16], strides = [1, 1]} : vector<2x48xf32> to vector<2x16xf32>
    %227 = arith.addf %225, %226 : vector<2x16xf32>
    %228 = arith.negf %227 : vector<2x16xf32>
    %229 = math.exp %228 : vector<2x16xf32>
    %cst_51 = arith.constant 1.000000e+00 : f32
    %230 = vector.broadcast %cst_51 : f32 to vector<2x16xf32>
    %231 = arith.addf %230, %229 : vector<2x16xf32>
    %232 = arith.divf %230, %231 : vector<2x16xf32>
    %233 = vector.extract_strided_slice %216 {offsets = [0, 32], sizes = [2, 16], strides = [1, 1]} : vector<2x48xf32> to vector<2x16xf32>
    %234 = vector.extract_strided_slice %214 {offsets = [0, 32], sizes = [2, 16], strides = [1, 1]} : vector<2x48xf32> to vector<2x16xf32>
    %235 = arith.mulf %224, %234 : vector<2x16xf32>
    %236 = arith.addf %233, %235 : vector<2x16xf32>
    %237 = math.tanh %236 : vector<2x16xf32>
    %cst_52 = arith.constant 1.000000e+00 : f32
    %238 = vector.broadcast %cst_52 : f32 to vector<2x16xf32>
    %239 = arith.subf %238, %232 : vector<2x16xf32>
    %240 = arith.mulf %239, %237 : vector<2x16xf32>
    %241 = arith.mulf %232, %211 : vector<2x16xf32>
    %242 = arith.addf %240, %241 : vector<2x16xf32>
    %cst_53 = arith.constant dense<0.000000e+00> : vector<2x48xf32>
    %243 = tpu.matmul %242, %10, %cst_53 {dimension_numbers = #tpu.dot_dimension_numbers<[1], [0], [0], [1], [0, 0, 1, 1], [], []>} : vector<2x16xf32>, vector<16x48xf32>, vector<2x48xf32> -> vector<2x48xf32>
    %244 = vector.broadcast %14 : vector<1x48xf32> to vector<2x48xf32>
    %245 = arith.addf %243, %244 : vector<2x48xf32>
    %246 = vector.extract_strided_slice %24 {offsets = [0, 7, 0], sizes = [2, 1, 48], strides = [1, 1, 1]} : vector<2x8x48xf32> to vector<2x1x48xf32>
    %247 = vector.shape_cast %246 : vector<2x1x48xf32> to vector<2x48xf32>
    %248 = vector.extract_strided_slice %247 {offsets = [0, 0], sizes = [2, 16], strides = [1, 1]} : vector<2x48xf32> to vector<2x16xf32>
    %249 = vector.extract_strided_slice %245 {offsets = [0, 0], sizes = [2, 16], strides = [1, 1]} : vector<2x48xf32> to vector<2x16xf32>
    %250 = arith.addf %248, %249 : vector<2x16xf32>
    %251 = arith.negf %250 : vector<2x16xf32>
    %252 = math.exp %251 : vector<2x16xf32>
    %cst_54 = arith.constant 1.000000e+00 : f32
    %253 = vector.broadcast %cst_54 : f32 to vector<2x16xf32>
    %254 = arith.addf %253, %252 : vector<2x16xf32>
    %255 = arith.divf %253, %254 : vector<2x16xf32>
    %256 = vector.extract_strided_slice %247 {offsets = [0, 16], sizes = [2, 16], strides = [1, 1]} : vector<2x48xf32> to vector<2x16xf32>
    %257 = vector.extract_strided_slice %245 {offsets = [0, 16], sizes = [2, 16], strides = [1, 1]} : vector<2x48xf32> to vector<2x16xf32>
    %258 = arith.addf %256, %257 : vector<2x16xf32>
    %259 = arith.negf %258 : vector<2x16xf32>
    %260 = math.exp %259 : vector<2x16xf32>
    %cst_55 = arith.constant 1.000000e+00 : f32
    %261 = vector.broadcast %cst_55 : f32 to vector<2x16xf32>
    %262 = arith.addf %261, %260 : vector<2x16xf32>
    %263 = arith.divf %261, %262 : vector<2x16xf32>
    %264 = vector.extract_strided_slice %247 {offsets = [0, 32], sizes = [2, 16], strides = [1, 1]} : vector<2x48xf32> to vector<2x16xf32>
    %265 = vector.extract_strided_slice %245 {offsets = [0, 32], sizes = [2, 16], strides = [1, 1]} : vector<2x48xf32> to vector<2x16xf32>
    %266 = arith.mulf %255, %265 : vector<2x16xf32>
    %267 = arith.addf %264, %266 : vector<2x16xf32>
    %268 = math.tanh %267 : vector<2x16xf32>
    %cst_56 = arith.constant 1.000000e+00 : f32
    %269 = vector.broadcast %cst_56 : f32 to vector<2x16xf32>
    %270 = arith.subf %269, %263 : vector<2x16xf32>
    %271 = arith.mulf %270, %268 : vector<2x16xf32>
    %272 = arith.mulf %263, %242 : vector<2x16xf32>
    %273 = arith.addf %271, %272 : vector<2x16xf32>
    %274 = vector.shape_cast %56 : vector<2x16xf32> to vector<2x1x16xf32>
    %275 = vector.shape_cast %87 : vector<2x16xf32> to vector<2x1x16xf32>
    %276 = vector.shape_cast %118 : vector<2x16xf32> to vector<2x1x16xf32>
    %277 = vector.shape_cast %149 : vector<2x16xf32> to vector<2x1x16xf32>
    %278 = vector.shape_cast %180 : vector<2x16xf32> to vector<2x1x16xf32>
    %279 = vector.shape_cast %211 : vector<2x16xf32> to vector<2x1x16xf32>
    %280 = vector.shape_cast %242 : vector<2x16xf32> to vector<2x1x16xf32>
    %281 = vector.shape_cast %273 : vector<2x16xf32> to vector<2x1x16xf32>
    %282 = tpu.concatenate %274, %275, %276, %277, %278, %279, %280, %281 in 1 : vector<2x1x16xf32>, vector<2x1x16xf32>, vector<2x1x16xf32>, vector<2x1x16xf32>, vector<2x1x16xf32>, vector<2x1x16xf32>, vector<2x1x16xf32>, vector<2x1x16xf32> -> vector<2x8x16xf32>
    %283 = vector.broadcast %2 : vector<2x8x1xf32> to vector<2x8x16xf32>
    %284 = arith.mulf %282, %283 : vector<2x8x16xf32>
    %c0_57 = arith.constant 0 : index
    %c0_58 = arith.constant 0 : index
    %c0_59 = arith.constant 0 : index
    %c0_60 = arith.constant 0 : index
    %285 = vector.load %arg9[%c0_57, %c0_58, %c0_59, %c0_60] : memref<2x2x8x16xf32, #tpu.memory_space<vmem>>, vector<1x2x8x16xf32>
    %286 = vector.shape_cast %285 : vector<1x2x8x16xf32> to vector<2x8x16xf32>
    %287 = vector.shape_cast %284 : vector<2x8x16xf32> to vector<1x2x8x16xf32>
    tpu.vector_store %arg9[%c0_57, %c0_58, %c0_59, %c0_60], %287 {strides = array<i32>} : memref<2x2x8x16xf32, #tpu.memory_space<vmem>>, vector<1x2x8x16xf32>,
    %288 = arith.mulf %284, %19 : vector<2x8x16xf32>
    %cst_61 = arith.constant dense<0.000000e+00> : vector<2x8xf32>
    %289 = vector.multi_reduction <add>, %288, %cst_61 [2] : vector<2x8x16xf32> to vector<2x8xf32>
    %c0_62 = arith.constant 0 : index
    %c0_63 = arith.constant 0 : index
    %c0_64 = arith.constant 0 : index
    %290 = vector.load %arg10[%c0_62, %c0_63, %c0_64] : memref<2x2x8xf32, #tpu.memory_space<vmem>>, vector<1x2x8xf32>
    %291 = vector.shape_cast %290 : vector<1x2x8xf32> to vector<2x8xf32>
    %292 = vector.shape_cast %289 : vector<2x8xf32> to vector<1x2x8xf32>
    tpu.vector_store %arg10[%c0_62, %c0_63, %c0_64], %292 {strides = array<i32>} : memref<2x2x8xf32, #tpu.memory_space<vmem>>, vector<1x2x8xf32>,
    %c1 = arith.constant 1 : index
    %c0_65 = arith.constant 0 : index
    %c0_66 = arith.constant 0 : index
    %c0_67 = arith.constant 0 : index
    %293 = vector.load %arg2[%c1, %c0_65, %c0_66, %c0_67] : memref<2x2x32x16xf32, #tpu.memory_space<vmem>>, vector<1x2x32x16xf32>
    %294 = vector.shape_cast %293 : vector<1x2x32x16xf32> to vector<2x32x16xf32>
    %c1_68 = arith.constant 1 : index
    %c0_69 = arith.constant 0 : index
    %c0_70 = arith.constant 0 : index
    %295 = vector.load %arg3[%c1_68, %c0_69, %c0_70] : memref<2x2x16xf32, #tpu.memory_space<vmem>>, vector<1x2x16xf32>
    %296 = vector.shape_cast %295 : vector<1x2x16xf32> to vector<2x16xf32>
    %c1_71 = arith.constant 1 : index
    %c0_72 = arith.constant 0 : index
    %c0_73 = arith.constant 0 : index
    %297 = vector.load %arg4[%c1_71, %c0_72, %c0_73] : memref<2x16x48xf32, #tpu.memory_space<vmem>>, vector<1x16x48xf32>
    %298 = vector.shape_cast %297 : vector<1x16x48xf32> to vector<16x48xf32>
    %c1_74 = arith.constant 1 : index
    %c0_75 = arith.constant 0 : index
    %c0_76 = arith.constant 0 : index
    %299 = vector.load %arg5[%c1_74, %c0_75, %c0_76] : memref<2x16x48xf32, #tpu.memory_space<vmem>>, vector<1x16x48xf32>
    %300 = vector.shape_cast %299 : vector<1x16x48xf32> to vector<16x48xf32>
    %c1_77 = arith.constant 1 : index
    %c0_78 = arith.constant 0 : index
    %c0_79 = arith.constant 0 : index
    %301 = vector.load %arg6[%c1_77, %c0_78, %c0_79] : memref<2x1x48xf32, #tpu.memory_space<vmem>>, vector<1x1x48xf32>
    %302 = vector.shape_cast %301 : vector<1x1x48xf32> to vector<1x48xf32>
    %c1_80 = arith.constant 1 : index
    %c0_81 = arith.constant 0 : index
    %c0_82 = arith.constant 0 : index
    %303 = vector.load %arg7[%c1_80, %c0_81, %c0_82] : memref<2x1x48xf32, #tpu.memory_space<vmem>>, vector<1x1x48xf32>
    %304 = vector.shape_cast %303 : vector<1x1x48xf32> to vector<1x48xf32>
    "tpu.trace_start"() <{level = 10 : i32, message = "bth,bhk->btk"}> : () -> ()
    %cst_83 = arith.constant dense<0.000000e+00> : vector<2x8x16xf32>
    %305 = tpu.matmul %0, %294, %cst_83 {dimension_numbers = #tpu.dot_dimension_numbers<[2], [1], [1], [2], [0, 0, 0, 1, 1, 2], [0], [0]>} : vector<2x8x32xf32>, vector<2x32x16xf32>, vector<2x8x16xf32> -> vector<2x8x16xf32>
    "tpu.trace_stop"() : () -> ()
    %306 = vector.shape_cast %296 : vector<2x16xf32> to vector<2x1x16xf32>
    %307 = vector.broadcast %306 : vector<2x1x16xf32> to vector<2x8x16xf32>
    %308 = arith.addf %305, %307 : vector<2x8x16xf32>
    %309 = math.tanh %308 : vector<2x8x16xf32>
    %310 = vector.shape_cast %309 : vector<2x8x16xf32> to vector<16x16xf32>
    %cst_84 = arith.constant dense<0.000000e+00> : vector<16x48xf32>
    %311 = tpu.matmul %310, %298, %cst_84 {dimension_numbers = #tpu.dot_dimension_numbers<[1], [0], [0], [1], [0, 0, 1, 1], [], []>} : vector<16x16xf32>, vector<16x48xf32>, vector<16x48xf32> -> vector<16x48xf32>
    %312 = vector.broadcast %302 : vector<1x48xf32> to vector<16x48xf32>
    %313 = arith.addf %311, %312 : vector<16x48xf32>
    %314 = vector.shape_cast %313 : vector<16x48xf32> to vector<2x8x48xf32>
    %cst_85 = arith.constant 0.000000e+00 : f32
    %315 = vector.broadcast %cst_85 : f32 to vector<2x16xf32>
    %cst_86 = arith.constant dense<0.000000e+00> : vector<2x48xf32>
    %316 = tpu.matmul %315, %300, %cst_86 {dimension_numbers = #tpu.dot_dimension_numbers<[1], [0], [0], [1], [0, 0, 1, 1], [], []>} : vector<2x16xf32>, vector<16x48xf32>, vector<2x48xf32> -> vector<2x48xf32>
    %317 = vector.broadcast %304 : vector<1x48xf32> to vector<2x48xf32>
    %318 = arith.addf %316, %317 : vector<2x48xf32>
    %319 = vector.extract_strided_slice %314 {offsets = [0, 0, 0], sizes = [2, 1, 48], strides = [1, 1, 1]} : vector<2x8x48xf32> to vector<2x1x48xf32>
    %320 = vector.shape_cast %319 : vector<2x1x48xf32> to vector<2x48xf32>
    %321 = vector.extract_strided_slice %320 {offsets = [0, 0], sizes = [2, 16], strides = [1, 1]} : vector<2x48xf32> to vector<2x16xf32>
    %322 = vector.extract_strided_slice %318 {offsets = [0, 0], sizes = [2, 16], strides = [1, 1]} : vector<2x48xf32> to vector<2x16xf32>
    %323 = arith.addf %321, %322 : vector<2x16xf32>
    %324 = arith.negf %323 : vector<2x16xf32>
    %325 = math.exp %324 : vector<2x16xf32>
    %cst_87 = arith.constant 1.000000e+00 : f32
    %326 = vector.broadcast %cst_87 : f32 to vector<2x16xf32>
    %327 = arith.addf %326, %325 : vector<2x16xf32>
    %328 = arith.divf %326, %327 : vector<2x16xf32>
    %329 = vector.extract_strided_slice %320 {offsets = [0, 16], sizes = [2, 16], strides = [1, 1]} : vector<2x48xf32> to vector<2x16xf32>
    %330 = vector.extract_strided_slice %318 {offsets = [0, 16], sizes = [2, 16], strides = [1, 1]} : vector<2x48xf32> to vector<2x16xf32>
    %331 = arith.addf %329, %330 : vector<2x16xf32>
    %332 = arith.negf %331 : vector<2x16xf32>
    %333 = math.exp %332 : vector<2x16xf32>
    %cst_88 = arith.constant 1.000000e+00 : f32
    %334 = vector.broadcast %cst_88 : f32 to vector<2x16xf32>
    %335 = arith.addf %334, %333 : vector<2x16xf32>
    %336 = arith.divf %334, %335 : vector<2x16xf32>
    %337 = vector.extract_strided_slice %320 {offsets = [0, 32], sizes = [2, 16], strides = [1, 1]} : vector<2x48xf32> to vector<2x16xf32>
    %338 = vector.extract_strided_slice %318 {offsets = [0, 32], sizes = [2, 16], strides = [1, 1]} : vector<2x48xf32> to vector<2x16xf32>
    %339 = arith.mulf %328, %338 : vector<2x16xf32>
    %340 = arith.addf %337, %339 : vector<2x16xf32>
    %341 = math.tanh %340 : vector<2x16xf32>
    %cst_89 = arith.constant 1.000000e+00 : f32
    %342 = vector.broadcast %cst_89 : f32 to vector<2x16xf32>
    %343 = arith.subf %342, %336 : vector<2x16xf32>
    %344 = arith.mulf %343, %341 : vector<2x16xf32>
    %345 = arith.mulf %336, %315 : vector<2x16xf32>
    %346 = arith.addf %344, %345 : vector<2x16xf32>
    %cst_90 = arith.constant dense<0.000000e+00> : vector<2x48xf32>
    %347 = tpu.matmul %346, %300, %cst_90 {dimension_numbers = #tpu.dot_dimension_numbers<[1], [0], [0], [1], [0, 0, 1, 1], [], []>} : vector<2x16xf32>, vector<16x48xf32>, vector<2x48xf32> -> vector<2x48xf32>
    %348 = vector.broadcast %304 : vector<1x48xf32> to vector<2x48xf32>
    %349 = arith.addf %347, %348 : vector<2x48xf32>
    %350 = vector.extract_strided_slice %314 {offsets = [0, 1, 0], sizes = [2, 1, 48], strides = [1, 1, 1]} : vector<2x8x48xf32> to vector<2x1x48xf32>
    %351 = vector.shape_cast %350 : vector<2x1x48xf32> to vector<2x48xf32>
    %352 = vector.extract_strided_slice %351 {offsets = [0, 0], sizes = [2, 16], strides = [1, 1]} : vector<2x48xf32> to vector<2x16xf32>
    %353 = vector.extract_strided_slice %349 {offsets = [0, 0], sizes = [2, 16], strides = [1, 1]} : vector<2x48xf32> to vector<2x16xf32>
    %354 = arith.addf %352, %353 : vector<2x16xf32>
    %355 = arith.negf %354 : vector<2x16xf32>
    %356 = math.exp %355 : vector<2x16xf32>
    %cst_91 = arith.constant 1.000000e+00 : f32
    %357 = vector.broadcast %cst_91 : f32 to vector<2x16xf32>
    %358 = arith.addf %357, %356 : vector<2x16xf32>
    %359 = arith.divf %357, %358 : vector<2x16xf32>
    %360 = vector.extract_strided_slice %351 {offsets = [0, 16], sizes = [2, 16], strides = [1, 1]} : vector<2x48xf32> to vector<2x16xf32>
    %361 = vector.extract_strided_slice %349 {offsets = [0, 16], sizes = [2, 16], strides = [1, 1]} : vector<2x48xf32> to vector<2x16xf32>
    %362 = arith.addf %360, %361 : vector<2x16xf32>
    %363 = arith.negf %362 : vector<2x16xf32>
    %364 = math.exp %363 : vector<2x16xf32>
    %cst_92 = arith.constant 1.000000e+00 : f32
    %365 = vector.broadcast %cst_92 : f32 to vector<2x16xf32>
    %366 = arith.addf %365, %364 : vector<2x16xf32>
    %367 = arith.divf %365, %366 : vector<2x16xf32>
    %368 = vector.extract_strided_slice %351 {offsets = [0, 32], sizes = [2, 16], strides = [1, 1]} : vector<2x48xf32> to vector<2x16xf32>
    %369 = vector.extract_strided_slice %349 {offsets = [0, 32], sizes = [2, 16], strides = [1, 1]} : vector<2x48xf32> to vector<2x16xf32>
    %370 = arith.mulf %359, %369 : vector<2x16xf32>
    %371 = arith.addf %368, %370 : vector<2x16xf32>
    %372 = math.tanh %371 : vector<2x16xf32>
    %cst_93 = arith.constant 1.000000e+00 : f32
    %373 = vector.broadcast %cst_93 : f32 to vector<2x16xf32>
    %374 = arith.subf %373, %367 : vector<2x16xf32>
    %375 = arith.mulf %374, %372 : vector<2x16xf32>
    %376 = arith.mulf %367, %346 : vector<2x16xf32>
    %377 = arith.addf %375, %376 : vector<2x16xf32>
    %cst_94 = arith.constant dense<0.000000e+00> : vector<2x48xf32>
    %378 = tpu.matmul %377, %300, %cst_94 {dimension_numbers = #tpu.dot_dimension_numbers<[1], [0], [0], [1], [0, 0, 1, 1], [], []>} : vector<2x16xf32>, vector<16x48xf32>, vector<2x48xf32> -> vector<2x48xf32>
    %379 = vector.broadcast %304 : vector<1x48xf32> to vector<2x48xf32>
    %380 = arith.addf %378, %379 : vector<2x48xf32>
    %381 = vector.extract_strided_slice %314 {offsets = [0, 2, 0], sizes = [2, 1, 48], strides = [1, 1, 1]} : vector<2x8x48xf32> to vector<2x1x48xf32>
    %382 = vector.shape_cast %381 : vector<2x1x48xf32> to vector<2x48xf32>
    %383 = vector.extract_strided_slice %382 {offsets = [0, 0], sizes = [2, 16], strides = [1, 1]} : vector<2x48xf32> to vector<2x16xf32>
    %384 = vector.extract_strided_slice %380 {offsets = [0, 0], sizes = [2, 16], strides = [1, 1]} : vector<2x48xf32> to vector<2x16xf32>
    %385 = arith.addf %383, %384 : vector<2x16xf32>
    %386 = arith.negf %385 : vector<2x16xf32>
    %387 = math.exp %386 : vector<2x16xf32>
    %cst_95 = arith.constant 1.000000e+00 : f32
    %388 = vector.broadcast %cst_95 : f32 to vector<2x16xf32>
    %389 = arith.addf %388, %387 : vector<2x16xf32>
    %390 = arith.divf %388, %389 : vector<2x16xf32>
    %391 = vector.extract_strided_slice %382 {offsets = [0, 16], sizes = [2, 16], strides = [1, 1]} : vector<2x48xf32> to vector<2x16xf32>
    %392 = vector.extract_strided_slice %380 {offsets = [0, 16], sizes = [2, 16], strides = [1, 1]} : vector<2x48xf32> to vector<2x16xf32>
    %393 = arith.addf %391, %392 : vector<2x16xf32>
    %394 = arith.negf %393 : vector<2x16xf32>
    %395 = math.exp %394 : vector<2x16xf32>
    %cst_96 = arith.constant 1.000000e+00 : f32
    %396 = vector.broadcast %cst_96 : f32 to vector<2x16xf32>
    %397 = arith.addf %396, %395 : vector<2x16xf32>
    %398 = arith.divf %396, %397 : vector<2x16xf32>
    %399 = vector.extract_strided_slice %382 {offsets = [0, 32], sizes = [2, 16], strides = [1, 1]} : vector<2x48xf32> to vector<2x16xf32>
    %400 = vector.extract_strided_slice %380 {offsets = [0, 32], sizes = [2, 16], strides = [1, 1]} : vector<2x48xf32> to vector<2x16xf32>
    %401 = arith.mulf %390, %400 : vector<2x16xf32>
    %402 = arith.addf %399, %401 : vector<2x16xf32>
    %403 = math.tanh %402 : vector<2x16xf32>
    %cst_97 = arith.constant 1.000000e+00 : f32
    %404 = vector.broadcast %cst_97 : f32 to vector<2x16xf32>
    %405 = arith.subf %404, %398 : vector<2x16xf32>
    %406 = arith.mulf %405, %403 : vector<2x16xf32>
    %407 = arith.mulf %398, %377 : vector<2x16xf32>
    %408 = arith.addf %406, %407 : vector<2x16xf32>
    %cst_98 = arith.constant dense<0.000000e+00> : vector<2x48xf32>
    %409 = tpu.matmul %408, %300, %cst_98 {dimension_numbers = #tpu.dot_dimension_numbers<[1], [0], [0], [1], [0, 0, 1, 1], [], []>} : vector<2x16xf32>, vector<16x48xf32>, vector<2x48xf32> -> vector<2x48xf32>
    %410 = vector.broadcast %304 : vector<1x48xf32> to vector<2x48xf32>
    %411 = arith.addf %409, %410 : vector<2x48xf32>
    %412 = vector.extract_strided_slice %314 {offsets = [0, 3, 0], sizes = [2, 1, 48], strides = [1, 1, 1]} : vector<2x8x48xf32> to vector<2x1x48xf32>
    %413 = vector.shape_cast %412 : vector<2x1x48xf32> to vector<2x48xf32>
    %414 = vector.extract_strided_slice %413 {offsets = [0, 0], sizes = [2, 16], strides = [1, 1]} : vector<2x48xf32> to vector<2x16xf32>
    %415 = vector.extract_strided_slice %411 {offsets = [0, 0], sizes = [2, 16], strides = [1, 1]} : vector<2x48xf32> to vector<2x16xf32>
    %416 = arith.addf %414, %415 : vector<2x16xf32>
    %417 = arith.negf %416 : vector<2x16xf32>
    %418 = math.exp %417 : vector<2x16xf32>
    %cst_99 = arith.constant 1.000000e+00 : f32
    %419 = vector.broadcast %cst_99 : f32 to vector<2x16xf32>
    %420 = arith.addf %419, %418 : vector<2x16xf32>
    %421 = arith.divf %419, %420 : vector<2x16xf32>
    %422 = vector.extract_strided_slice %413 {offsets = [0, 16], sizes = [2, 16], strides = [1, 1]} : vector<2x48xf32> to vector<2x16xf32>
    %423 = vector.extract_strided_slice %411 {offsets = [0, 16], sizes = [2, 16], strides = [1, 1]} : vector<2x48xf32> to vector<2x16xf32>
    %424 = arith.addf %422, %423 : vector<2x16xf32>
    %425 = arith.negf %424 : vector<2x16xf32>
    %426 = math.exp %425 : vector<2x16xf32>
    %cst_100 = arith.constant 1.000000e+00 : f32
    %427 = vector.broadcast %cst_100 : f32 to vector<2x16xf32>
    %428 = arith.addf %427, %426 : vector<2x16xf32>
    %429 = arith.divf %427, %428 : vector<2x16xf32>
    %430 = vector.extract_strided_slice %413 {offsets = [0, 32], sizes = [2, 16], strides = [1, 1]} : vector<2x48xf32> to vector<2x16xf32>
    %431 = vector.extract_strided_slice %411 {offsets = [0, 32], sizes = [2, 16], strides = [1, 1]} : vector<2x48xf32> to vector<2x16xf32>
    %432 = arith.mulf %421, %431 : vector<2x16xf32>
    %433 = arith.addf %430, %432 : vector<2x16xf32>
    %434 = math.tanh %433 : vector<2x16xf32>
    %cst_101 = arith.constant 1.000000e+00 : f32
    %435 = vector.broadcast %cst_101 : f32 to vector<2x16xf32>
    %436 = arith.subf %435, %429 : vector<2x16xf32>
    %437 = arith.mulf %436, %434 : vector<2x16xf32>
    %438 = arith.mulf %429, %408 : vector<2x16xf32>
    %439 = arith.addf %437, %438 : vector<2x16xf32>
    %cst_102 = arith.constant dense<0.000000e+00> : vector<2x48xf32>
    %440 = tpu.matmul %439, %300, %cst_102 {dimension_numbers = #tpu.dot_dimension_numbers<[1], [0], [0], [1], [0, 0, 1, 1], [], []>} : vector<2x16xf32>, vector<16x48xf32>, vector<2x48xf32> -> vector<2x48xf32>
    %441 = vector.broadcast %304 : vector<1x48xf32> to vector<2x48xf32>
    %442 = arith.addf %440, %441 : vector<2x48xf32>
    %443 = vector.extract_strided_slice %314 {offsets = [0, 4, 0], sizes = [2, 1, 48], strides = [1, 1, 1]} : vector<2x8x48xf32> to vector<2x1x48xf32>
    %444 = vector.shape_cast %443 : vector<2x1x48xf32> to vector<2x48xf32>
    %445 = vector.extract_strided_slice %444 {offsets = [0, 0], sizes = [2, 16], strides = [1, 1]} : vector<2x48xf32> to vector<2x16xf32>
    %446 = vector.extract_strided_slice %442 {offsets = [0, 0], sizes = [2, 16], strides = [1, 1]} : vector<2x48xf32> to vector<2x16xf32>
    %447 = arith.addf %445, %446 : vector<2x16xf32>
    %448 = arith.negf %447 : vector<2x16xf32>
    %449 = math.exp %448 : vector<2x16xf32>
    %cst_103 = arith.constant 1.000000e+00 : f32
    %450 = vector.broadcast %cst_103 : f32 to vector<2x16xf32>
    %451 = arith.addf %450, %449 : vector<2x16xf32>
    %452 = arith.divf %450, %451 : vector<2x16xf32>
    %453 = vector.extract_strided_slice %444 {offsets = [0, 16], sizes = [2, 16], strides = [1, 1]} : vector<2x48xf32> to vector<2x16xf32>
    %454 = vector.extract_strided_slice %442 {offsets = [0, 16], sizes = [2, 16], strides = [1, 1]} : vector<2x48xf32> to vector<2x16xf32>
    %455 = arith.addf %453, %454 : vector<2x16xf32>
    %456 = arith.negf %455 : vector<2x16xf32>
    %457 = math.exp %456 : vector<2x16xf32>
    %cst_104 = arith.constant 1.000000e+00 : f32
    %458 = vector.broadcast %cst_104 : f32 to vector<2x16xf32>
    %459 = arith.addf %458, %457 : vector<2x16xf32>
    %460 = arith.divf %458, %459 : vector<2x16xf32>
    %461 = vector.extract_strided_slice %444 {offsets = [0, 32], sizes = [2, 16], strides = [1, 1]} : vector<2x48xf32> to vector<2x16xf32>
    %462 = vector.extract_strided_slice %442 {offsets = [0, 32], sizes = [2, 16], strides = [1, 1]} : vector<2x48xf32> to vector<2x16xf32>
    %463 = arith.mulf %452, %462 : vector<2x16xf32>
    %464 = arith.addf %461, %463 : vector<2x16xf32>
    %465 = math.tanh %464 : vector<2x16xf32>
    %cst_105 = arith.constant 1.000000e+00 : f32
    %466 = vector.broadcast %cst_105 : f32 to vector<2x16xf32>
    %467 = arith.subf %466, %460 : vector<2x16xf32>
    %468 = arith.mulf %467, %465 : vector<2x16xf32>
    %469 = arith.mulf %460, %439 : vector<2x16xf32>
    %470 = arith.addf %468, %469 : vector<2x16xf32>
    %cst_106 = arith.constant dense<0.000000e+00> : vector<2x48xf32>
    %471 = tpu.matmul %470, %300, %cst_106 {dimension_numbers = #tpu.dot_dimension_numbers<[1], [0], [0], [1], [0, 0, 1, 1], [], []>} : vector<2x16xf32>, vector<16x48xf32>, vector<2x48xf32> -> vector<2x48xf32>
    %472 = vector.broadcast %304 : vector<1x48xf32> to vector<2x48xf32>
    %473 = arith.addf %471, %472 : vector<2x48xf32>
    %474 = vector.extract_strided_slice %314 {offsets = [0, 5, 0], sizes = [2, 1, 48], strides = [1, 1, 1]} : vector<2x8x48xf32> to vector<2x1x48xf32>
    %475 = vector.shape_cast %474 : vector<2x1x48xf32> to vector<2x48xf32>
    %476 = vector.extract_strided_slice %475 {offsets = [0, 0], sizes = [2, 16], strides = [1, 1]} : vector<2x48xf32> to vector<2x16xf32>
    %477 = vector.extract_strided_slice %473 {offsets = [0, 0], sizes = [2, 16], strides = [1, 1]} : vector<2x48xf32> to vector<2x16xf32>
    %478 = arith.addf %476, %477 : vector<2x16xf32>
    %479 = arith.negf %478 : vector<2x16xf32>
    %480 = math.exp %479 : vector<2x16xf32>
    %cst_107 = arith.constant 1.000000e+00 : f32
    %481 = vector.broadcast %cst_107 : f32 to vector<2x16xf32>
    %482 = arith.addf %481, %480 : vector<2x16xf32>
    %483 = arith.divf %481, %482 : vector<2x16xf32>
    %484 = vector.extract_strided_slice %475 {offsets = [0, 16], sizes = [2, 16], strides = [1, 1]} : vector<2x48xf32> to vector<2x16xf32>
    %485 = vector.extract_strided_slice %473 {offsets = [0, 16], sizes = [2, 16], strides = [1, 1]} : vector<2x48xf32> to vector<2x16xf32>
    %486 = arith.addf %484, %485 : vector<2x16xf32>
    %487 = arith.negf %486 : vector<2x16xf32>
    %488 = math.exp %487 : vector<2x16xf32>
    %cst_108 = arith.constant 1.000000e+00 : f32
    %489 = vector.broadcast %cst_108 : f32 to vector<2x16xf32>
    %490 = arith.addf %489, %488 : vector<2x16xf32>
    %491 = arith.divf %489, %490 : vector<2x16xf32>
    %492 = vector.extract_strided_slice %475 {offsets = [0, 32], sizes = [2, 16], strides = [1, 1]} : vector<2x48xf32> to vector<2x16xf32>
    %493 = vector.extract_strided_slice %473 {offsets = [0, 32], sizes = [2, 16], strides = [1, 1]} : vector<2x48xf32> to vector<2x16xf32>
    %494 = arith.mulf %483, %493 : vector<2x16xf32>
    %495 = arith.addf %492, %494 : vector<2x16xf32>
    %496 = math.tanh %495 : vector<2x16xf32>
    %cst_109 = arith.constant 1.000000e+00 : f32
    %497 = vector.broadcast %cst_109 : f32 to vector<2x16xf32>
    %498 = arith.subf %497, %491 : vector<2x16xf32>
    %499 = arith.mulf %498, %496 : vector<2x16xf32>
    %500 = arith.mulf %491, %470 : vector<2x16xf32>
    %501 = arith.addf %499, %500 : vector<2x16xf32>
    %cst_110 = arith.constant dense<0.000000e+00> : vector<2x48xf32>
    %502 = tpu.matmul %501, %300, %cst_110 {dimension_numbers = #tpu.dot_dimension_numbers<[1], [0], [0], [1], [0, 0, 1, 1], [], []>} : vector<2x16xf32>, vector<16x48xf32>, vector<2x48xf32> -> vector<2x48xf32>
    %503 = vector.broadcast %304 : vector<1x48xf32> to vector<2x48xf32>
    %504 = arith.addf %502, %503 : vector<2x48xf32>
    %505 = vector.extract_strided_slice %314 {offsets = [0, 6, 0], sizes = [2, 1, 48], strides = [1, 1, 1]} : vector<2x8x48xf32> to vector<2x1x48xf32>
    %506 = vector.shape_cast %505 : vector<2x1x48xf32> to vector<2x48xf32>
    %507 = vector.extract_strided_slice %506 {offsets = [0, 0], sizes = [2, 16], strides = [1, 1]} : vector<2x48xf32> to vector<2x16xf32>
    %508 = vector.extract_strided_slice %504 {offsets = [0, 0], sizes = [2, 16], strides = [1, 1]} : vector<2x48xf32> to vector<2x16xf32>
    %509 = arith.addf %507, %508 : vector<2x16xf32>
    %510 = arith.negf %509 : vector<2x16xf32>
    %511 = math.exp %510 : vector<2x16xf32>
    %cst_111 = arith.constant 1.000000e+00 : f32
    %512 = vector.broadcast %cst_111 : f32 to vector<2x16xf32>
    %513 = arith.addf %512, %511 : vector<2x16xf32>
    %514 = arith.divf %512, %513 : vector<2x16xf32>
    %515 = vector.extract_strided_slice %506 {offsets = [0, 16], sizes = [2, 16], strides = [1, 1]} : vector<2x48xf32> to vector<2x16xf32>
    %516 = vector.extract_strided_slice %504 {offsets = [0, 16], sizes = [2, 16], strides = [1, 1]} : vector<2x48xf32> to vector<2x16xf32>
    %517 = arith.addf %515, %516 : vector<2x16xf32>
    %518 = arith.negf %517 : vector<2x16xf32>
    %519 = math.exp %518 : vector<2x16xf32>
    %cst_112 = arith.constant 1.000000e+00 : f32
    %520 = vector.broadcast %cst_112 : f32 to vector<2x16xf32>
    %521 = arith.addf %520, %519 : vector<2x16xf32>
    %522 = arith.divf %520, %521 : vector<2x16xf32>
    %523 = vector.extract_strided_slice %506 {offsets = [0, 32], sizes = [2, 16], strides = [1, 1]} : vector<2x48xf32> to vector<2x16xf32>
    %524 = vector.extract_strided_slice %504 {offsets = [0, 32], sizes = [2, 16], strides = [1, 1]} : vector<2x48xf32> to vector<2x16xf32>
    %525 = arith.mulf %514, %524 : vector<2x16xf32>
    %526 = arith.addf %523, %525 : vector<2x16xf32>
    %527 = math.tanh %526 : vector<2x16xf32>
    %cst_113 = arith.constant 1.000000e+00 : f32
    %528 = vector.broadcast %cst_113 : f32 to vector<2x16xf32>
    %529 = arith.subf %528, %522 : vector<2x16xf32>
    %530 = arith.mulf %529, %527 : vector<2x16xf32>
    %531 = arith.mulf %522, %501 : vector<2x16xf32>
    %532 = arith.addf %530, %531 : vector<2x16xf32>
    %cst_114 = arith.constant dense<0.000000e+00> : vector<2x48xf32>
    %533 = tpu.matmul %532, %300, %cst_114 {dimension_numbers = #tpu.dot_dimension_numbers<[1], [0], [0], [1], [0, 0, 1, 1], [], []>} : vector<2x16xf32>, vector<16x48xf32>, vector<2x48xf32> -> vector<2x48xf32>
    %534 = vector.broadcast %304 : vector<1x48xf32> to vector<2x48xf32>
    %535 = arith.addf %533, %534 : vector<2x48xf32>
    %536 = vector.extract_strided_slice %314 {offsets = [0, 7, 0], sizes = [2, 1, 48], strides = [1, 1, 1]} : vector<2x8x48xf32> to vector<2x1x48xf32>
    %537 = vector.shape_cast %536 : vector<2x1x48xf32> to vector<2x48xf32>
    %538 = vector.extract_strided_slice %537 {offsets = [0, 0], sizes = [2, 16], strides = [1, 1]} : vector<2x48xf32> to vector<2x16xf32>
    %539 = vector.extract_strided_slice %535 {offsets = [0, 0], sizes = [2, 16], strides = [1, 1]} : vector<2x48xf32> to vector<2x16xf32>
    %540 = arith.addf %538, %539 : vector<2x16xf32>
    %541 = arith.negf %540 : vector<2x16xf32>
    %542 = math.exp %541 : vector<2x16xf32>
    %cst_115 = arith.constant 1.000000e+00 : f32
    %543 = vector.broadcast %cst_115 : f32 to vector<2x16xf32>
    %544 = arith.addf %543, %542 : vector<2x16xf32>
    %545 = arith.divf %543, %544 : vector<2x16xf32>
    %546 = vector.extract_strided_slice %537 {offsets = [0, 16], sizes = [2, 16], strides = [1, 1]} : vector<2x48xf32> to vector<2x16xf32>
    %547 = vector.extract_strided_slice %535 {offsets = [0, 16], sizes = [2, 16], strides = [1, 1]} : vector<2x48xf32> to vector<2x16xf32>
    %548 = arith.addf %546, %547 : vector<2x16xf32>
    %549 = arith.negf %548 : vector<2x16xf32>
    %550 = math.exp %549 : vector<2x16xf32>
    %cst_116 = arith.constant 1.000000e+00 : f32
    %551 = vector.broadcast %cst_116 : f32 to vector<2x16xf32>
    %552 = arith.addf %551, %550 : vector<2x16xf32>
    %553 = arith.divf %551, %552 : vector<2x16xf32>
    %554 = vector.extract_strided_slice %537 {offsets = [0, 32], sizes = [2, 16], strides = [1, 1]} : vector<2x48xf32> to vector<2x16xf32>
    %555 = vector.extract_strided_slice %535 {offsets = [0, 32], sizes = [2, 16], strides = [1, 1]} : vector<2x48xf32> to vector<2x16xf32>
    %556 = arith.mulf %545, %555 : vector<2x16xf32>
    %557 = arith.addf %554, %556 : vector<2x16xf32>
    %558 = math.tanh %557 : vector<2x16xf32>
    %cst_117 = arith.constant 1.000000e+00 : f32
    %559 = vector.broadcast %cst_117 : f32 to vector<2x16xf32>
    %560 = arith.subf %559, %553 : vector<2x16xf32>
    %561 = arith.mulf %560, %558 : vector<2x16xf32>
    %562 = arith.mulf %553, %532 : vector<2x16xf32>
    %563 = arith.addf %561, %562 : vector<2x16xf32>
    %564 = vector.shape_cast %346 : vector<2x16xf32> to vector<2x1x16xf32>
    %565 = vector.shape_cast %377 : vector<2x16xf32> to vector<2x1x16xf32>
    %566 = vector.shape_cast %408 : vector<2x16xf32> to vector<2x1x16xf32>
    %567 = vector.shape_cast %439 : vector<2x16xf32> to vector<2x1x16xf32>
    %568 = vector.shape_cast %470 : vector<2x16xf32> to vector<2x1x16xf32>
    %569 = vector.shape_cast %501 : vector<2x16xf32> to vector<2x1x16xf32>
    %570 = vector.shape_cast %532 : vector<2x16xf32> to vector<2x1x16xf32>
    %571 = vector.shape_cast %563 : vector<2x16xf32> to vector<2x1x16xf32>
    %572 = tpu.concatenate %564, %565, %566, %567, %568, %569, %570, %571 in 1 : vector<2x1x16xf32>, vector<2x1x16xf32>, vector<2x1x16xf32>, vector<2x1x16xf32>, vector<2x1x16xf32>, vector<2x1x16xf32>, vector<2x1x16xf32>, vector<2x1x16xf32> -> vector<2x8x16xf32>
    %573 = vector.broadcast %2 : vector<2x8x1xf32> to vector<2x8x16xf32>
    %574 = arith.mulf %572, %573 : vector<2x8x16xf32>
    %c1_118 = arith.constant 1 : index
    %c0_119 = arith.constant 0 : index
    %c0_120 = arith.constant 0 : index
    %c0_121 = arith.constant 0 : index
    %575 = vector.load %arg9[%c1_118, %c0_119, %c0_120, %c0_121] : memref<2x2x8x16xf32, #tpu.memory_space<vmem>>, vector<1x2x8x16xf32>
    %576 = vector.shape_cast %575 : vector<1x2x8x16xf32> to vector<2x8x16xf32>
    %577 = vector.shape_cast %574 : vector<2x8x16xf32> to vector<1x2x8x16xf32>
    tpu.vector_store %arg9[%c1_118, %c0_119, %c0_120, %c0_121], %577 {strides = array<i32>} : memref<2x2x8x16xf32, #tpu.memory_space<vmem>>, vector<1x2x8x16xf32>,
    %578 = arith.mulf %574, %309 : vector<2x8x16xf32>
    %cst_122 = arith.constant dense<0.000000e+00> : vector<2x8xf32>
    %579 = vector.multi_reduction <add>, %578, %cst_122 [2] : vector<2x8x16xf32> to vector<2x8xf32>
    %c1_123 = arith.constant 1 : index
    %c0_124 = arith.constant 0 : index
    %c0_125 = arith.constant 0 : index
    %580 = vector.load %arg10[%c1_123, %c0_124, %c0_125] : memref<2x2x8xf32, #tpu.memory_space<vmem>>, vector<1x2x8xf32>
    %581 = vector.shape_cast %580 : vector<1x2x8xf32> to vector<2x8xf32>
    %582 = vector.shape_cast %579 : vector<2x8xf32> to vector<1x2x8xf32>
    tpu.vector_store %arg10[%c1_123, %c0_124, %c0_125], %582 {strides = array<i32>} : memref<2x2x8xf32, #tpu.memory_space<vmem>>, vector<1x2x8xf32>,
    return
  }
  func.func @transform_0(%arg0: i32) -> (i32, i32, i32) {
    %c0_i32 = arith.constant 0 : i32
    %c0_i32_0 = arith.constant 0 : i32
    %c0_i32_1 = arith.constant 0 : i32
    %c0_i32_2 = arith.constant 0 : i32
    return %c0_i32, %c0_i32_0, %c0_i32_1 : i32, i32, i32
  }
  func.func @transform_1(%arg0: i32) -> (i32, i32, i32, i32) {
    %c0_i32 = arith.constant 0 : i32
    %c0_i32_0 = arith.constant 0 : i32
    %c0_i32_1 = arith.constant 0 : i32
    %c0_i32_2 = arith.constant 0 : i32
    return %arg0, %c0_i32, %c0_i32_0, %c0_i32_1 : i32, i32, i32, i32
  }
  func.func @transform_2(%arg0: i32) -> (i32, i32, i32) {
    %c0_i32 = arith.constant 0 : i32
    %c0_i32_0 = arith.constant 0 : i32
    %c0_i32_1 = arith.constant 0 : i32
    return %arg0, %c0_i32, %c0_i32_0 : i32, i32, i32
  }
  func.func @transform_3(%arg0: i32) -> (i32, i32, i32) {
    %c0_i32 = arith.constant 0 : i32
    %c0_i32_0 = arith.constant 0 : i32
    %c0_i32_1 = arith.constant 0 : i32
    return %arg0, %c0_i32, %c0_i32_0 : i32, i32, i32
  }
  func.func @transform_4(%arg0: i32) -> (i32, i32, i32) {
    %c0_i32 = arith.constant 0 : i32
    %c0_i32_0 = arith.constant 0 : i32
    %c0_i32_1 = arith.constant 0 : i32
    return %arg0, %c0_i32, %c0_i32_0 : i32, i32, i32
  }
  func.func @transform_5(%arg0: i32) -> (i32, i32, i32) {
    %c0_i32 = arith.constant 0 : i32
    %c0_i32_0 = arith.constant 0 : i32
    %c0_i32_1 = arith.constant 0 : i32
    return %arg0, %c0_i32, %c0_i32_0 : i32, i32, i32
  }
  func.func @transform_6(%arg0: i32) -> (i32, i32, i32) {
    %c0_i32 = arith.constant 0 : i32
    %c0_i32_0 = arith.constant 0 : i32
    %c0_i32_1 = arith.constant 0 : i32
    return %arg0, %c0_i32, %c0_i32_0 : i32, i32, i32
  }
  func.func @transform_7(%arg0: i32) -> (i32, i32) {
    %c0_i32 = arith.constant 0 : i32
    %c0_i32_0 = arith.constant 0 : i32
    %c0_i32_1 = arith.constant 0 : i32
    return %c0_i32, %c0_i32_0 : i32, i32
  }
  func.func @transform_8(%arg0: i32) -> (i32, i32, i32, i32) {
    %c0_i32 = arith.constant 0 : i32
    %c0_i32_0 = arith.constant 0 : i32
    %c0_i32_1 = arith.constant 0 : i32
    %c0_i32_2 = arith.constant 0 : i32
    return %arg0, %c0_i32, %c0_i32_0, %c0_i32_1 : i32, i32, i32, i32
  }
  func.func @transform_9(%arg0: i32) -> (i32, i32, i32) {
    %c0_i32 = arith.constant 0 : i32
    %c0_i32_0 = arith.constant 0 : i32
    %c0_i32_1 = arith.constant 0 : i32
    return %arg0, %c0_i32, %c0_i32_0 : i32, i32, i32
  }
}

</mosaic_0001>

<llo_original>
// kernel: cmla_forward.1
$region0: #{cmla_forward.1}
  #allocation0 [shape = 'u32[]', space=smem, size = 0x4, offset = 0x4, fixed_abs, tag = 'smem constant byte address 0x4 - core index']
  #allocation1 [shape = 'u32[72,128]{1,0:T(1,128)}', space=vmem, size = 0x9000, scoped, tag = 'internal scratch']
  %s0 = inlined_call_operand.vmem [shape: f32[2,8,32], index: 0, kind: input, shape index: {}]
  %s1 = inlined_call_operand.vmem [shape: f32[2,2,32,16], index: 1, kind: input, shape index: {}]
  %s2 = inlined_call_operand.vmem [shape: f32[2,2,16], index: 2, kind: input, shape index: {}]
  %s3 = inlined_call_operand.vmem [shape: f32[2,16,48], index: 3, kind: input, shape index: {}]
  %s4 = inlined_call_operand.vmem [shape: f32[2,16,48], index: 4, kind: input, shape index: {}]
  %s5 = inlined_call_operand.vmem [shape: f32[2,1,48], index: 5, kind: input, shape index: {}]
  %s6 = inlined_call_operand.vmem [shape: f32[2,1,48], index: 6, kind: input, shape index: {}]
  %s7 = inlined_call_operand.vmem [shape: f32[2,8], index: 7, kind: input, shape index: {}]
  %s8 = inlined_call_operand.vmem [shape: f32[2,2,8,16], index: 8, kind: output, shape index: {0}]
  %s9 = inlined_call_operand.vmem [shape: f32[2,2,8], index: 9, kind: output, shape index: {1}]
  %10 = xla_tuple %s8, %s9
  %s11 = sld [smem:[#allocation0]]
  $region50: #{cmla_forward.1} parent=0
    _
  %s13 = ssub.s32 1, %s11
  %s14 = scalar_select 0, %s13, %s11
  // Predicated region
  $region2: #{cmla_forward.1} parent=0 // pred_check
    _
  $region3: #{cmla_forward.1} parent=0 // pred_check_branch
    %16 = sbr.rel (0) target = $region5
  $region4: #{cmla_forward.1} parent=0 // pred_region
    _
  $region5: #{cmla_forward.1} parent=0 // pred_fallthru
    _
  // Predicated region
  $region6: #{cmla_forward.1} parent=0 // pred_check
    _
  $region7: #{cmla_forward.1} parent=0 // pred_check_branch
    %18 = sbr.rel (0) target = $region9
  $region8: #{cmla_forward.1} parent=0 // pred_region
    _
  $region9: #{cmla_forward.1} parent=0 // pred_fallthru
    _
  // Predicated region
  $region10: #{cmla_forward.1} parent=0 // pred_check
    _
  $region11: #{cmla_forward.1} parent=0 // pred_check_branch
    %20 = sbr.rel (0) target = $region13
  $region12: #{cmla_forward.1} parent=0 // pred_region
    _
  $region13: #{cmla_forward.1} parent=0 // pred_fallthru
    _
  // Predicated region
  $region14: #{cmla_forward.1} parent=0 // pred_check
    _
  $region15: #{cmla_forward.1} parent=0 // pred_check_branch
    %22 = sbr.rel (0) target = $region17
  $region16: #{cmla_forward.1} parent=0 // pred_region
    _
  $region17: #{cmla_forward.1} parent=0 // pred_fallthru
    _
  // Predicated region
  $region18: #{cmla_forward.1} parent=0 // pred_check
    _
  $region19: #{cmla_forward.1} parent=0 // pred_check_branch
    %24 = sbr.rel (0) target = $region21
  $region20: #{cmla_forward.1} parent=0 // pred_region
    _
  $region21: #{cmla_forward.1} parent=0 // pred_fallthru
    _
  // Predicated region
  $region22: #{cmla_forward.1} parent=0 // pred_check
    _
  $region23: #{cmla_forward.1} parent=0 // pred_check_branch
    %26 = sbr.rel (0) target = $region25
  $region24: #{cmla_forward.1} parent=0 // pred_region
    _
  $region25: #{cmla_forward.1} parent=0 // pred_fallthru
    _
  // Predicated region
  $region26: #{cmla_forward.1} parent=0 // pred_check
    _
  $region27: #{cmla_forward.1} parent=0 // pred_check_branch
    %28 = sbr.rel (0) target = $region29
  $region28: #{cmla_forward.1} parent=0 // pred_region
    _
  $region29: #{cmla_forward.1} parent=0 // pred_fallthru
    _
  // Predicated region
  $region30: #{cmla_forward.1} parent=0 // pred_check
    _
  $region31: #{cmla_forward.1} parent=0 // pred_check_branch
    %30 = sbr.rel (0) target = $region33
  $region32: #{cmla_forward.1} parent=0 // pred_region
    _
  $region33: #{cmla_forward.1} parent=0 // pred_fallthru
    _
  %v31 = vld [vmem:[%s0] sm:$0xff]
  %v32 = vld [vmem:[%s0 + $0x8] sm:$0xff]
  %v33 = vld [vmem:[%s7] sm:$0x3]
  %v34 = vperm.slane %v33, 0
  %v35 = vlaneseq
  %v36 = vshrl.u32 %v35, 7
  %38 = vset.pattern.permute.xlu0 %v36
  %39 = vperm.xlu0 %38, %v34
  %v40 = vpop.permute.xlu0 %39
  %v41 = vperm.slane %v33, 1
  %v42 = vlaneseq
  %v43 = vshrl.u32 %v42, 7
  %45 = vset.pattern.permute.xlu0 %v43
  %46 = vperm.xlu0 %45, %v41
  %v47 = vpop.permute.xlu0 %46
  %v48 = vld [vmem:[%s1] sm:$0xff]
  %v49 = vld [vmem:[%s1 + $0x8] sm:$0xff]
  %v50 = vld [vmem:[%s1 + $0x10] sm:$0xff]
  %v51 = vld [vmem:[%s1 + $0x18] sm:$0xff]
  %v52 = vld [vmem:[%s1 + $0x20] sm:$0xff]
  %v53 = vld [vmem:[%s1 + $0x28] sm:$0xff]
  %v54 = vld [vmem:[%s1 + $0x30] sm:$0xff]
  %v55 = vld [vmem:[%s1 + $0x38] sm:$0xff]
  %v56 = vld [vmem:[%s2] sm:$0x3]
  %v57 = vld [vmem:[%s3] sm:$0xff]
  %v58 = vld [vmem:[%s3 + $0x8] sm:$0xff]
  %v59 = vld [vmem:[%s4] sm:$0xff]
  %v60 = vld [vmem:[%s4 + $0x8] sm:$0xff]
  %v61 = vld [vmem:[%s5] sm:$0x1]
  %v62 = vld [vmem:[%s6] sm:$0x1]
  %v64 = vrot.slane %v56, 1
  %v65 = vperm.slane %v56, 0
  %v66 = vperm.slane %v64, 0
  %vm69 = vcmask 261120
  %v71 = vsel %vm69, %v31, 0
  %73 = vmatpush.msra.mxu0 0.0
  %74 = vmatpush.msra.mxu0 0.0
  %75 = vmatpush.msra.mxu0 0.0
  %76 = vmatpush.msra.mxu0 0.0
  %77 = vmatpush.msra.mxu0 0.0
  %78 = vmatpush.msra.mxu0 0.0
  %79 = vmatpush.msra.mxu0 0.0
  %80 = vmatpush.msra.mxu0 0.0
  %81 = vmatpush.msra.mxu0 0.0
  %82 = vmatpush.msra.mxu0 0.0
  %83 = vmatpush.msra.mxu0 0.0
  %84 = vmatpush.msra.mxu0 0.0
  %85 = vmatpush.msra.mxu0 %v51
  %86 = vmatpush.msra.mxu0 %v50
  %87 = vmatpush.msra.mxu0 %v49
  %88 = vmatpush.msra.mxu0 %v48
  %89 = vmatmul.f32.gmra.mxu0 %v71
  %v90 = vpop.f32.mrf.mxu0
  %v91 = vadd.f32 %v65, %v90
  %92 = vdwg.mxu0
  %v94 = vsel %vm69, %v32, 0
  %96 = vmatpush.msra.mxu0 0.0
  %97 = vmatpush.msra.mxu0 0.0
  %98 = vmatpush.msra.mxu0 0.0
  %99 = vmatpush.msra.mxu0 0.0
  %100 = vmatpush.msra.mxu0 0.0
  %101 = vmatpush.msra.mxu0 0.0
  %102 = vmatpush.msra.mxu0 0.0
  %103 = vmatpush.msra.mxu0 0.0
  %104 = vmatpush.msra.mxu0 0.0
  %105 = vmatpush.msra.mxu0 0.0
  %106 = vmatpush.msra.mxu0 0.0
  %107 = vmatpush.msra.mxu0 0.0
  %108 = vmatpush.msra.mxu0 %v55
  %109 = vmatpush.msra.mxu0 %v54
  %110 = vmatpush.msra.mxu0 %v53
  %111 = vmatpush.msra.mxu0 %v52
  %112 = vmatmul.f32.gmra.mxu0 %v94
  %v113 = vpop.f32.mrf.mxu0
  %v114 = vadd.f32 %v66, %v113
  %115 = vdwg.mxu0
  %v116 = vtanh.pop %v91
  %v117 = vtanh.pop %v114
  %v119 = vperm.slane %v61, 0
  %vm121 = vcmask 130048
  %v123 = vsel %vm121, %v116, 0
  %v126 = vsel %vm121, %v117, 0
  %128 = vmatpush.msra.mxu0 0.0
  %129 = vmatpush.msra.mxu0 0.0
  %130 = vmatpush.msra.mxu0 0.0
  %131 = vmatpush.msra.mxu0 0.0
  %132 = vmatpush.msra.mxu0 0.0
  %133 = vmatpush.msra.mxu0 0.0
  %134 = vmatpush.msra.mxu0 0.0
  %135 = vmatpush.msra.mxu0 0.0
  %136 = vmatpush.msra.mxu0 0.0
  %137 = vmatpush.msra.mxu0 0.0
  %138 = vmatpush.msra.mxu0 0.0
  %139 = vmatpush.msra.mxu0 0.0
  %140 = vmatpush.msra.mxu0 0.0
  %141 = vmatpush.msra.mxu0 0.0
  %142 = vmatpush.msra.mxu0 %v58
  %143 = vmatpush.msra.mxu0 %v57
  %144 = vmatmul.f32.gmra.mxu0 %v123
  %v145 = vpop.f32.mrf.mxu0
  %v146 = vadd.f32 %v119, %v145
  %147 = vmatmul.f32.gmra.mxu0 %v126
  %v148 = vpop.f32.mrf.mxu0
  %v149 = vadd.f32 %v119, %v148
  %150 = vdwg.mxu0
  %v152 = vperm.slane %v62, 0
  %v155 = vsel %vm121, 0.0, 0
  %157 = vmatpush.msra.mxu0 0.0
  %158 = vmatpush.msra.mxu0 0.0
  %159 = vmatpush.msra.mxu0 0.0
  %160 = vmatpush.msra.mxu0 0.0
  %161 = vmatpush.msra.mxu0 0.0
  %162 = vmatpush.msra.mxu0 0.0
  %163 = vmatpush.msra.mxu0 0.0
  %164 = vmatpush.msra.mxu0 0.0
  %165 = vmatpush.msra.mxu0 0.0
  %166 = vmatpush.msra.mxu0 0.0
  %167 = vmatpush.msra.mxu0 0.0
  %168 = vmatpush.msra.mxu0 0.0
  %169 = vmatpush.msra.mxu0 0.0
  %170 = vmatpush.msra.mxu0 0.0
  %171 = vmatpush.msra.mxu0 %v60
  %172 = vmatpush.msra.mxu0 %v59
  %173 = vmatmul.f32.gmra.mxu0 %v155
  %v174 = vpop.f32.mrf.mxu0
  %v175 = vadd.f32 %v152, %v174
  %176 = vdwg.mxu0
  %v178 = vrot.slane %v175, 1
  %v181 = vadd.f32 %v146, %v175
  %v182 = vadd.f32 %v149, %v178
  %v183 = vxor.u32 %v181, 2147483648
  %v184 = vxor.u32 %v182, 2147483648
  %v185 = vmul.f32 %v183, 1.442695
  %v186 = vpow.pop %v185
  %v187 = vmul.f32 %v184, 1.442695
  %v188 = vpow.pop %v187
  %v189 = vadd.f32 %v186, 1.0
  %v190 = vadd.f32 %v188, 1.0
  %v191 = vrcp.pop %v189
  %v192 = vmul.f32 %v189, %v191
  %v193 = vsub.f32 1.0, %v192
  %v194 = vmul.f32 %v191, %v193
  %v195 = vadd.f32 %v191, %v194
  %vm196 = vweird.f32 %v189
  %vm197 = vweird.f32 %v191
  %vm198 = vmor %vm196, %vm197
  %v199 = vsel %vm198, %v191, %v195
  %v200 = vand.u32 2147483647, %v189
  %vm201 = vcmp.eq.f32.partialorder %v200, 8.507059e+37
  %v202 = vand.u32 %v189, 2147483648
  %v203 = vor.u32 1.1754944e-38, %v202
  %v204 = vsel %vm201, %v203, %v199
  %v205 = vmul.f32 1.0, %v204
  %v206 = vrcp.pop %v190
  %v207 = vmul.f32 %v190, %v206
  %v208 = vsub.f32 1.0, %v207
  %v209 = vmul.f32 %v206, %v208
  %v210 = vadd.f32 %v206, %v209
  %vm211 = vweird.f32 %v190
  %vm212 = vweird.f32 %v206
  %vm213 = vmor %vm211, %vm212
  %v214 = vsel %vm213, %v206, %v210
  %v215 = vand.u32 2147483647, %v190
  %vm216 = vcmp.eq.f32.partialorder %v215, 8.507059e+37
  %v217 = vand.u32 %v190, 2147483648
  %v218 = vor.u32 1.1754944e-38, %v217
  %v219 = vsel %vm216, %v218, %v214
  %v220 = vmul.f32 1.0, %v219
  %221 = vrot.lane.b32.xlu0 %v175, 96
  %v222 = vpop.permute.xlu0 %221
  %223 = vrot.lane.b32.xlu0 %v178, 96
  %v224 = vpop.permute.xlu0 %223
  %v227 = vmul.f32 %v205, %v222
  %v228 = vmul.f32 %v220, %v224
  %231 = vrot.lane.b32.xlu0 %v227, 32
  %v232 = vpop.permute.xlu0 %231
  %233 = vrot.lane.b32.xlu0 %v228, 32
  %v234 = vpop.permute.xlu0 %233
  %v237 = vadd.f32 %v146, %v232
  %v238 = vadd.f32 %v149, %v234
  %v239 = vtanh.pop %v237
  %v240 = vtanh.pop %v238
  %v241 = vsub.f32 1.0, %v205
  %v242 = vsub.f32 1.0, %v220
  %245 = vrot.lane.b32.xlu0 %v239, 112
  %v246 = vpop.permute.xlu0 %245
  %247 = vrot.lane.b32.xlu0 %v240, 112
  %v248 = vpop.permute.xlu0 %247
  %v251 = vmul.f32 %v241, %v246
  %v252 = vmul.f32 %v242, %v248
  %v253 = vmul.f32 %v205, 0.0
  %v254 = vmul.f32 %v220, 0.0
  %v255 = vadd.f32 %v251, %v253
  %v256 = vadd.f32 %v252, %v254
  %v259 = vrot.slane %v256, 7
  %vm260 = vcmask 1041409
  %v261 = vsel %vm260, %v259, %v255
  %262 = vrot.lane.b32.xlu0 %v261, 112
  %v263 = vpop.permute.xlu0 %262
  %v264 = vsel %vm121, %v263, 0
  %266 = vmatpush.msra.mxu0 0.0
  %267 = vmatpush.msra.mxu0 0.0
  %268 = vmatpush.msra.mxu0 0.0
  %269 = vmatpush.msra.mxu0 0.0
  %270 = vmatpush.msra.mxu0 0.0
  %271 = vmatpush.msra.mxu0 0.0
  %272 = vmatpush.msra.mxu0 0.0
  %273 = vmatpush.msra.mxu0 0.0
  %274 = vmatpush.msra.mxu0 0.0
  %275 = vmatpush.msra.mxu0 0.0
  %276 = vmatpush.msra.mxu0 0.0
  %277 = vmatpush.msra.mxu0 0.0
  %278 = vmatpush.msra.mxu0 0.0
  %279 = vmatpush.msra.mxu0 0.0
  %280 = vmatpush.msra.mxu0 %v60
  %281 = vmatpush.msra.mxu0 %v59
  %282 = vmatmul.f32.gmra.mxu0 %v264
  %v283 = vpop.f32.mrf.mxu0
  %v284 = vadd.f32 %v152, %v283
  %285 = vdwg.mxu0
  %v287 = vrot.slane %v284, 7
  %v290 = vadd.f32 %v146, %v287
  %v291 = vadd.f32 %v149, %v284
  %v292 = vxor.u32 %v290, 2147483648
  %v293 = vxor.u32 %v291, 2147483648
  %v294 = vmul.f32 %v292, 1.442695
  %v295 = vpow.pop %v294
  %v296 = vmul.f32 %v293, 1.442695
  %v297 = vpow.pop %v296
  %v298 = vadd.f32 %v295, 1.0
  %v299 = vadd.f32 %v297, 1.0
  %v300 = vrcp.pop %v298
  %v301 = vmul.f32 %v298, %v300
  %v302 = vsub.f32 1.0, %v301
  %v303 = vmul.f32 %v300, %v302
  %v304 = vadd.f32 %v300, %v303
  %vm305 = vweird.f32 %v298
  %vm306 = vweird.f32 %v300
  %vm307 = vmor %vm305, %vm306
  %v308 = vsel %vm307, %v300, %v304
  %v309 = vand.u32 2147483647, %v298
  %vm310 = vcmp.eq.f32.partialorder %v309, 8.507059e+37
  %v311 = vand.u32 %v298, 2147483648
  %v312 = vor.u32 1.1754944e-38, %v311
  %v313 = vsel %vm310, %v312, %v308
  %v314 = vmul.f32 1.0, %v313
  %v315 = vrcp.pop %v299
  %v316 = vmul.f32 %v299, %v315
  %v317 = vsub.f32 1.0, %v316
  %v318 = vmul.f32 %v315, %v317
  %v319 = vadd.f32 %v315, %v318
  %vm320 = vweird.f32 %v299
  %vm321 = vweird.f32 %v315
  %vm322 = vmor %vm320, %vm321
  %v323 = vsel %vm322, %v315, %v319
  %v324 = vand.u32 2147483647, %v299
  %vm325 = vcmp.eq.f32.partialorder %v324, 8.507059e+37
  %v326 = vand.u32 %v299, 2147483648
  %v327 = vor.u32 1.1754944e-38, %v326
  %v328 = vsel %vm325, %v327, %v323
  %v329 = vmul.f32 1.0, %v328
  %330 = vrot.lane.b32.xlu0 %v287, 96
  %v331 = vpop.permute.xlu0 %330
  %332 = vrot.lane.b32.xlu0 %v284, 96
  %v333 = vpop.permute.xlu0 %332
  %v336 = vmul.f32 %v314, %v331
  %v337 = vmul.f32 %v329, %v333
  %340 = vrot.lane.b32.xlu0 %v336, 32
  %v341 = vpop.permute.xlu0 %340
  %342 = vrot.lane.b32.xlu0 %v337, 32
  %v343 = vpop.permute.xlu0 %342
  %v346 = vadd.f32 %v146, %v341
  %v347 = vadd.f32 %v149, %v343
  %v348 = vtanh.pop %v346
  %v349 = vtanh.pop %v347
  %v350 = vsub.f32 1.0, %v314
  %v351 = vsub.f32 1.0, %v329
  %354 = vrot.lane.b32.xlu0 %v348, 112
  %v355 = vpop.permute.xlu0 %354
  %356 = vrot.lane.b32.xlu0 %v349, 112
  %v357 = vpop.permute.xlu0 %356
  %v360 = vmul.f32 %v350, %v355
  %v361 = vmul.f32 %v351, %v357
  %v362 = vrot.slane %v255, 7
  %v365 = vmul.f32 %v314, %v362
  %v366 = vmul.f32 %v329, %v259
  %v367 = vadd.f32 %v360, %v365
  %v368 = vadd.f32 %v361, %v366
  %v371 = vrot.slane %v367, 1
  %v372 = vsel %vm260, %v368, %v371
  %373 = vrot.lane.b32.xlu0 %v372, 112
  %v374 = vpop.permute.xlu0 %373
  %v375 = vsel %vm121, %v374, 0
  %377 = vmatpush.msra.mxu0 0.0
  %378 = vmatpush.msra.mxu0 0.0
  %379 = vmatpush.msra.mxu0 0.0
  %380 = vmatpush.msra.mxu0 0.0
  %381 = vmatpush.msra.mxu0 0.0
  %382 = vmatpush.msra.mxu0 0.0
  %383 = vmatpush.msra.mxu0 0.0
  %384 = vmatpush.msra.mxu0 0.0
  %385 = vmatpush.msra.mxu0 0.0
  %386 = vmatpush.msra.mxu0 0.0
  %387 = vmatpush.msra.mxu0 0.0
  %388 = vmatpush.msra.mxu0 0.0
  %389 = vmatpush.msra.mxu0 0.0
  %390 = vmatpush.msra.mxu0 0.0
  %391 = vmatpush.msra.mxu0 %v60
  %392 = vmatpush.msra.mxu0 %v59
  %393 = vmatmul.f32.gmra.mxu0 %v375
  %v394 = vpop.f32.mrf.mxu0
  %v395 = vadd.f32 %v152, %v394
  %396 = vdwg.mxu0
  %v398 = vrot.slane %v395, 6
  %v399 = vrot.slane %v395, 7
  %v402 = vadd.f32 %v146, %v398
  %v403 = vadd.f32 %v149, %v399
  %v404 = vxor.u32 %v402, 2147483648
  %v405 = vxor.u32 %v403, 2147483648
  %v406 = vmul.f32 %v404, 1.442695
  %v407 = vpow.pop %v406
  %v408 = vmul.f32 %v405, 1.442695
  %v409 = vpow.pop %v408
  %v410 = vadd.f32 %v407, 1.0
  %v411 = vadd.f32 %v409, 1.0
  %v412 = vrcp.pop %v410
  %v413 = vmul.f32 %v410, %v412
  %v414 = vsub.f32 1.0, %v413
  %v415 = vmul.f32 %v412, %v414
  %v416 = vadd.f32 %v412, %v415
  %vm417 = vweird.f32 %v410
  %vm418 = vweird.f32 %v412
  %vm419 = vmor %vm417, %vm418
  %v420 = vsel %vm419, %v412, %v416
  %v421 = vand.u32 2147483647, %v410
  %vm422 = vcmp.eq.f32.partialorder %v421, 8.507059e+37
  %v423 = vand.u32 %v410, 2147483648
  %v424 = vor.u32 1.1754944e-38, %v423
  %v425 = vsel %vm422, %v424, %v420
  %v426 = vmul.f32 1.0, %v425
  %v427 = vrcp.pop %v411
  %v428 = vmul.f32 %v411, %v427
  %v429 = vsub.f32 1.0, %v428
  %v430 = vmul.f32 %v427, %v429
  %v431 = vadd.f32 %v427, %v430
  %vm432 = vweird.f32 %v411
  %vm433 = vweird.f32 %v427
  %vm434 = vmor %vm432, %vm433
  %v435 = vsel %vm434, %v427, %v431
  %v436 = vand.u32 2147483647, %v411
  %vm437 = vcmp.eq.f32.partialorder %v436, 8.507059e+37
  %v438 = vand.u32 %v411, 2147483648
  %v439 = vor.u32 1.1754944e-38, %v438
  %v440 = vsel %vm437, %v439, %v435
  %v441 = vmul.f32 1.0, %v440
  %442 = vrot.lane.b32.xlu0 %v398, 96
  %v443 = vpop.permute.xlu0 %442
  %444 = vrot.lane.b32.xlu0 %v399, 96
  %v445 = vpop.permute.xlu0 %444
  %v448 = vmul.f32 %v426, %v443
  %v449 = vmul.f32 %v441, %v445
  %452 = vrot.lane.b32.xlu0 %v448, 32
  %v453 = vpop.permute.xlu0 %452
  %454 = vrot.lane.b32.xlu0 %v449, 32
  %v455 = vpop.permute.xlu0 %454
  %v458 = vadd.f32 %v146, %v453
  %v459 = vadd.f32 %v149, %v455
  %v460 = vtanh.pop %v458
  %v461 = vtanh.pop %v459
  %v462 = vsub.f32 1.0, %v426
  %v463 = vsub.f32 1.0, %v441
  %466 = vrot.lane.b32.xlu0 %v460, 112
  %v467 = vpop.permute.xlu0 %466
  %468 = vrot.lane.b32.xlu0 %v461, 112
  %v469 = vpop.permute.xlu0 %468
  %v472 = vmul.f32 %v462, %v467
  %v473 = vmul.f32 %v463, %v469
  %v474 = vrot.slane %v367, 7
  %v475 = vrot.slane %v368, 7
  %v478 = vmul.f32 %v426, %v474
  %v479 = vmul.f32 %v441, %v475
  %v480 = vadd.f32 %v472, %v478
  %v481 = vadd.f32 %v473, %v479
  %v484 = vrot.slane %v480, 2
  %v485 = vrot.slane %v481, 1
  %v486 = vsel %vm260, %v485, %v484
  %487 = vrot.lane.b32.xlu0 %v486, 112
  %v488 = vpop.permute.xlu0 %487
  %v489 = vsel %vm121, %v488, 0
  %491 = vmatpush.msra.mxu0 0.0
  %492 = vmatpush.msra.mxu0 0.0
  %493 = vmatpush.msra.mxu0 0.0
  %494 = vmatpush.msra.mxu0 0.0
  %495 = vmatpush.msra.mxu0 0.0
  %496 = vmatpush.msra.mxu0 0.0
  %497 = vmatpush.msra.mxu0 0.0
  %498 = vmatpush.msra.mxu0 0.0
  %499 = vmatpush.msra.mxu0 0.0
  %500 = vmatpush.msra.mxu0 0.0
  %501 = vmatpush.msra.mxu0 0.0
  %502 = vmatpush.msra.mxu0 0.0
  %503 = vmatpush.msra.mxu0 0.0
  %504 = vmatpush.msra.mxu0 0.0
  %505 = vmatpush.msra.mxu0 %v60
  %506 = vmatpush.msra.mxu0 %v59
  %507 = vmatmul.f32.gmra.mxu0 %v489
  %v508 = vpop.f32.mrf.mxu0
  %v509 = vadd.f32 %v152, %v508
  %510 = vdwg.mxu0
  %v512 = vrot.slane %v509, 5
  %v513 = vrot.slane %v509, 6
  %v516 = vadd.f32 %v146, %v512
  %v517 = vadd.f32 %v149, %v513
  %v518 = vxor.u32 %v516, 2147483648
  %v519 = vxor.u32 %v517, 2147483648
  %v520 = vmul.f32 %v518, 1.442695
  %v521 = vpow.pop %v520
  %v522 = vmul.f32 %v519, 1.442695
  %v523 = vpow.pop %v522
  %v524 = vadd.f32 %v521, 1.0
  %v525 = vadd.f32 %v523, 1.0
  %v526 = vrcp.pop %v524
  %v527 = vmul.f32 %v524, %v526
  %v528 = vsub.f32 1.0, %v527
  %v529 = vmul.f32 %v526, %v528
  %v530 = vadd.f32 %v526, %v529
  %vm531 = vweird.f32 %v524
  %vm532 = vweird.f32 %v526
  %vm533 = vmor %vm531, %vm532
  %v534 = vsel %vm533, %v526, %v530
  %v535 = vand.u32 2147483647, %v524
  %vm536 = vcmp.eq.f32.partialorder %v535, 8.507059e+37
  %v537 = vand.u32 %v524, 2147483648
  %v538 = vor.u32 1.1754944e-38, %v537
  %v539 = vsel %vm536, %v538, %v534
  %v540 = vmul.f32 1.0, %v539
  %v541 = vrcp.pop %v525
  %v542 = vmul.f32 %v525, %v541
  %v543 = vsub.f32 1.0, %v542
  %v544 = vmul.f32 %v541, %v543
  %v545 = vadd.f32 %v541, %v544
  %vm546 = vweird.f32 %v525
  %vm547 = vweird.f32 %v541
  %vm548 = vmor %vm546, %vm547
  %v549 = vsel %vm548, %v541, %v545
  %v550 = vand.u32 2147483647, %v525
  %vm551 = vcmp.eq.f32.partialorder %v550, 8.507059e+37
  %v552 = vand.u32 %v525, 2147483648
  %v553 = vor.u32 1.1754944e-38, %v552
  %v554 = vsel %vm551, %v553, %v549
  %v555 = vmul.f32 1.0, %v554
  %556 = vrot.lane.b32.xlu0 %v512, 96
  %v557 = vpop.permute.xlu0 %556
  %558 = vrot.lane.b32.xlu0 %v513, 96
  %v559 = vpop.permute.xlu0 %558
  %v562 = vmul.f32 %v540, %v557
  %v563 = vmul.f32 %v555, %v559
  %566 = vrot.lane.b32.xlu0 %v562, 32
  %v567 = vpop.permute.xlu0 %566
  %568 = vrot.lane.b32.xlu0 %v563, 32
  %v569 = vpop.permute.xlu0 %568
  %v572 = vadd.f32 %v146, %v567
  %v573 = vadd.f32 %v149, %v569
  %v574 = vtanh.pop %v572
  %v575 = vtanh.pop %v573
  %v576 = vsub.f32 1.0, %v540
  %v577 = vsub.f32 1.0, %v555
  %580 = vrot.lane.b32.xlu0 %v574, 112
  %v581 = vpop.permute.xlu0 %580
  %582 = vrot.lane.b32.xlu0 %v575, 112
  %v583 = vpop.permute.xlu0 %582
  %v586 = vmul.f32 %v576, %v581
  %v587 = vmul.f32 %v577, %v583
  %v588 = vrot.slane %v480, 7
  %v589 = vrot.slane %v481, 7
  %v592 = vmul.f32 %v540, %v588
  %v593 = vmul.f32 %v555, %v589
  %v594 = vadd.f32 %v586, %v592
  %v595 = vadd.f32 %v587, %v593
  %v598 = vrot.slane %v594, 3
  %v599 = vrot.slane %v595, 2
  %v600 = vsel %vm260, %v599, %v598
  %601 = vrot.lane.b32.xlu0 %v600, 112
  %v602 = vpop.permute.xlu0 %601
  %v603 = vsel %vm121, %v602, 0
  %605 = vmatpush.msra.mxu0 0.0
  %606 = vmatpush.msra.mxu0 0.0
  %607 = vmatpush.msra.mxu0 0.0
  %608 = vmatpush.msra.mxu0 0.0
  %609 = vmatpush.msra.mxu0 0.0
  %610 = vmatpush.msra.mxu0 0.0
  %611 = vmatpush.msra.mxu0 0.0
  %612 = vmatpush.msra.mxu0 0.0
  %613 = vmatpush.msra.mxu0 0.0
  %614 = vmatpush.msra.mxu0 0.0
  %615 = vmatpush.msra.mxu0 0.0
  %616 = vmatpush.msra.mxu0 0.0
  %617 = vmatpush.msra.mxu0 0.0
  %618 = vmatpush.msra.mxu0 0.0
  %619 = vmatpush.msra.mxu0 %v60
  %620 = vmatpush.msra.mxu0 %v59
  %621 = vmatmul.f32.gmra.mxu0 %v603
  %v622 = vpop.f32.mrf.mxu0
  %v623 = vadd.f32 %v152, %v622
  %624 = vdwg.mxu0
  %v626 = vrot.slane %v623, 4
  %v627 = vrot.slane %v623, 5
  %v630 = vadd.f32 %v146, %v626
  %v631 = vadd.f32 %v149, %v627
  %v632 = vxor.u32 %v630, 2147483648
  %v633 = vxor.u32 %v631, 2147483648
  %v634 = vmul.f32 %v632, 1.442695
  %v635 = vpow.pop %v634
  %v636 = vmul.f32 %v633, 1.442695
  %v637 = vpow.pop %v636
  %v638 = vadd.f32 %v635, 1.0
  %v639 = vadd.f32 %v637, 1.0
  %v640 = vrcp.pop %v638
  %v641 = vmul.f32 %v638, %v640
  %v642 = vsub.f32 1.0, %v641
  %v643 = vmul.f32 %v640, %v642
  %v644 = vadd.f32 %v640, %v643
  %vm645 = vweird.f32 %v638
  %vm646 = vweird.f32 %v640
  %vm647 = vmor %vm645, %vm646
  %v648 = vsel %vm647, %v640, %v644
  %v649 = vand.u32 2147483647, %v638
  %vm650 = vcmp.eq.f32.partialorder %v649, 8.507059e+37
  %v651 = vand.u32 %v638, 2147483648
  %v652 = vor.u32 1.1754944e-38, %v651
  %v653 = vsel %vm650, %v652, %v648
  %v654 = vmul.f32 1.0, %v653
  %v655 = vrcp.pop %v639
  %v656 = vmul.f32 %v639, %v655
  %v657 = vsub.f32 1.0, %v656
  %v658 = vmul.f32 %v655, %v657
  %v659 = vadd.f32 %v655, %v658
  %vm660 = vweird.f32 %v639
  %vm661 = vweird.f32 %v655
  %vm662 = vmor %vm660, %vm661
  %v663 = vsel %vm662, %v655, %v659
  %v664 = vand.u32 2147483647, %v639
  %vm665 = vcmp.eq.f32.partialorder %v664, 8.507059e+37
  %v666 = vand.u32 %v639, 2147483648
  %v667 = vor.u32 1.1754944e-38, %v666
  %v668 = vsel %vm665, %v667, %v663
  %v669 = vmul.f32 1.0, %v668
  %670 = vrot.lane.b32.xlu0 %v626, 96
  %v671 = vpop.permute.xlu0 %670
  %672 = vrot.lane.b32.xlu0 %v627, 96
  %v673 = vpop.permute.xlu0 %672
  %v676 = vmul.f32 %v654, %v671
  %v677 = vmul.f32 %v669, %v673
  %680 = vrot.lane.b32.xlu0 %v676, 32
  %v681 = vpop.permute.xlu0 %680
  %682 = vrot.lane.b32.xlu0 %v677, 32
  %v683 = vpop.permute.xlu0 %682
  %v686 = vadd.f32 %v146, %v681
  %v687 = vadd.f32 %v149, %v683
  %v688 = vtanh.pop %v686
  %v689 = vtanh.pop %v687
  %v690 = vsub.f32 1.0, %v654
  %v691 = vsub.f32 1.0, %v669
  %694 = vrot.lane.b32.xlu0 %v688, 112
  %v695 = vpop.permute.xlu0 %694
  %696 = vrot.lane.b32.xlu0 %v689, 112
  %v697 = vpop.permute.xlu0 %696
  %v700 = vmul.f32 %v690, %v695
  %v701 = vmul.f32 %v691, %v697
  %v702 = vrot.slane %v594, 7
  %v703 = vrot.slane %v595, 7
  %v706 = vmul.f32 %v654, %v702
  %v707 = vmul.f32 %v669, %v703
  %v708 = vadd.f32 %v700, %v706
  %v709 = vadd.f32 %v701, %v707
  %v712 = vrot.slane %v708, 4
  %v713 = vrot.slane %v709, 3
  %v714 = vsel %vm260, %v713, %v712
  %715 = vrot.lane.b32.xlu0 %v714, 112
  %v716 = vpop.permute.xlu0 %715
  %v717 = vsel %vm121, %v716, 0
  %719 = vmatpush.msra.mxu0 0.0
  %720 = vmatpush.msra.mxu0 0.0
  %721 = vmatpush.msra.mxu0 0.0
  %722 = vmatpush.msra.mxu0 0.0
  %723 = vmatpush.msra.mxu0 0.0
  %724 = vmatpush.msra.mxu0 0.0
  %725 = vmatpush.msra.mxu0 0.0
  %726 = vmatpush.msra.mxu0 0.0
  %727 = vmatpush.msra.mxu0 0.0
  %728 = vmatpush.msra.mxu0 0.0
  %729 = vmatpush.msra.mxu0 0.0
  %730 = vmatpush.msra.mxu0 0.0
  %731 = vmatpush.msra.mxu0 0.0
  %732 = vmatpush.msra.mxu0 0.0
  %733 = vmatpush.msra.mxu0 %v60
  %734 = vmatpush.msra.mxu0 %v59
  %735 = vmatmul.f32.gmra.mxu0 %v717
  %v736 = vpop.f32.mrf.mxu0
  %v737 = vadd.f32 %v152, %v736
  %738 = vdwg.mxu0
  %v740 = vrot.slane %v737, 3
  %v741 = vrot.slane %v737, 4
  %v744 = vadd.f32 %v146, %v740
  %v745 = vadd.f32 %v149, %v741
  %v746 = vxor.u32 %v744, 2147483648
  %v747 = vxor.u32 %v745, 2147483648
  %v748 = vmul.f32 %v746, 1.442695
  %v749 = vpow.pop %v748
  %v750 = vmul.f32 %v747, 1.442695
  %v751 = vpow.pop %v750
  %v752 = vadd.f32 %v749, 1.0
  %v753 = vadd.f32 %v751, 1.0
  %v754 = vrcp.pop %v752
  %v755 = vmul.f32 %v752, %v754
  %v756 = vsub.f32 1.0, %v755
  %v757 = vmul.f32 %v754, %v756
  %v758 = vadd.f32 %v754, %v757
  %vm759 = vweird.f32 %v752
  %vm760 = vweird.f32 %v754
  %vm761 = vmor %vm759, %vm760
  %v762 = vsel %vm761, %v754, %v758
  %v763 = vand.u32 2147483647, %v752
  %vm764 = vcmp.eq.f32.partialorder %v763, 8.507059e+37
  %v765 = vand.u32 %v752, 2147483648
  %v766 = vor.u32 1.1754944e-38, %v765
  %v767 = vsel %vm764, %v766, %v762
  %v768 = vmul.f32 1.0, %v767
  %v769 = vrcp.pop %v753
  %v770 = vmul.f32 %v753, %v769
  %v771 = vsub.f32 1.0, %v770
  %v772 = vmul.f32 %v769, %v771
  %v773 = vadd.f32 %v769, %v772
  %vm774 = vweird.f32 %v753
  %vm775 = vweird.f32 %v769
  %vm776 = vmor %vm774, %vm775
  %v777 = vsel %vm776, %v769, %v773
  %v778 = vand.u32 2147483647, %v753
  %vm779 = vcmp.eq.f32.partialorder %v778, 8.507059e+37
  %v780 = vand.u32 %v753, 2147483648
  %v781 = vor.u32 1.1754944e-38, %v780
  %v782 = vsel %vm779, %v781, %v777
  %v783 = vmul.f32 1.0, %v782
  %784 = vrot.lane.b32.xlu0 %v740, 96
  %v785 = vpop.permute.xlu0 %784
  %786 = vrot.lane.b32.xlu0 %v741, 96
  %v787 = vpop.permute.xlu0 %786
  %v790 = vmul.f32 %v768, %v785
  %v791 = vmul.f32 %v783, %v787
  %794 = vrot.lane.b32.xlu0 %v790, 32
  %v795 = vpop.permute.xlu0 %794
  %796 = vrot.lane.b32.xlu0 %v791, 32
  %v797 = vpop.permute.xlu0 %796
  %v800 = vadd.f32 %v146, %v795
  %v801 = vadd.f32 %v149, %v797
  %v802 = vtanh.pop %v800
  %v803 = vtanh.pop %v801
  %v804 = vsub.f32 1.0, %v768
  %v805 = vsub.f32 1.0, %v783
  %808 = vrot.lane.b32.xlu0 %v802, 112
  %v809 = vpop.permute.xlu0 %808
  %810 = vrot.lane.b32.xlu0 %v803, 112
  %v811 = vpop.permute.xlu0 %810
  %v814 = vmul.f32 %v804, %v809
  %v815 = vmul.f32 %v805, %v811
  %v816 = vrot.slane %v708, 7
  %v817 = vrot.slane %v709, 7
  %v820 = vmul.f32 %v768, %v816
  %v821 = vmul.f32 %v783, %v817
  %v822 = vadd.f32 %v814, %v820
  %v823 = vadd.f32 %v815, %v821
  %v826 = vrot.slane %v822, 5
  %v827 = vrot.slane %v823, 4
  %v828 = vsel %vm260, %v827, %v826
  %829 = vrot.lane.b32.xlu0 %v828, 112
  %v830 = vpop.permute.xlu0 %829
  %v831 = vsel %vm121, %v830, 0
  %833 = vmatpush.msra.mxu0 0.0
  %834 = vmatpush.msra.mxu0 0.0
  %835 = vmatpush.msra.mxu0 0.0
  %836 = vmatpush.msra.mxu0 0.0
  %837 = vmatpush.msra.mxu0 0.0
  %838 = vmatpush.msra.mxu0 0.0
  %839 = vmatpush.msra.mxu0 0.0
  %840 = vmatpush.msra.mxu0 0.0
  %841 = vmatpush.msra.mxu0 0.0
  %842 = vmatpush.msra.mxu0 0.0
  %843 = vmatpush.msra.mxu0 0.0
  %844 = vmatpush.msra.mxu0 0.0
  %845 = vmatpush.msra.mxu0 0.0
  %846 = vmatpush.msra.mxu0 0.0
  %847 = vmatpush.msra.mxu0 %v60
  %848 = vmatpush.msra.mxu0 %v59
  %849 = vmatmul.f32.gmra.mxu0 %v831
  %v850 = vpop.f32.mrf.mxu0
  %v851 = vadd.f32 %v152, %v850
  %852 = vdwg.mxu0
  %v854 = vrot.slane %v851, 2
  %v855 = vrot.slane %v851, 3
  %v858 = vadd.f32 %v146, %v854
  %v859 = vadd.f32 %v149, %v855
  %v860 = vxor.u32 %v858, 2147483648
  %v861 = vxor.u32 %v859, 2147483648
  %v862 = vmul.f32 %v860, 1.442695
  %v863 = vpow.pop %v862
  %v864 = vmul.f32 %v861, 1.442695
  %v865 = vpow.pop %v864
  %v866 = vadd.f32 %v863, 1.0
  %v867 = vadd.f32 %v865, 1.0
  %v868 = vrcp.pop %v866
  %v869 = vmul.f32 %v866, %v868
  %v870 = vsub.f32 1.0, %v869
  %v871 = vmul.f32 %v868, %v870
  %v872 = vadd.f32 %v868, %v871
  %vm873 = vweird.f32 %v866
  %vm874 = vweird.f32 %v868
  %vm875 = vmor %vm873, %vm874
  %v876 = vsel %vm875, %v868, %v872
  %v877 = vand.u32 2147483647, %v866
  %vm878 = vcmp.eq.f32.partialorder %v877, 8.507059e+37
  %v879 = vand.u32 %v866, 2147483648
  %v880 = vor.u32 1.1754944e-38, %v879
  %v881 = vsel %vm878, %v880, %v876
  %v882 = vmul.f32 1.0, %v881
  %v883 = vrcp.pop %v867
  %v884 = vmul.f32 %v867, %v883
  %v885 = vsub.f32 1.0, %v884
  %v886 = vmul.f32 %v883, %v885
  %v887 = vadd.f32 %v883, %v886
  %vm888 = vweird.f32 %v867
  %vm889 = vweird.f32 %v883
  %vm890 = vmor %vm888, %vm889
  %v891 = vsel %vm890, %v883, %v887
  %v892 = vand.u32 2147483647, %v867
  %vm893 = vcmp.eq.f32.partialorder %v892, 8.507059e+37
  %v894 = vand.u32 %v867, 2147483648
  %v895 = vor.u32 1.1754944e-38, %v894
  %v896 = vsel %vm893, %v895, %v891
  %v897 = vmul.f32 1.0, %v896
  %898 = vrot.lane.b32.xlu0 %v854, 96
  %v899 = vpop.permute.xlu0 %898
  %900 = vrot.lane.b32.xlu0 %v855, 96
  %v901 = vpop.permute.xlu0 %900
  %v904 = vmul.f32 %v882, %v899
  %v905 = vmul.f32 %v897, %v901
  %908 = vrot.lane.b32.xlu0 %v904, 32
  %v909 = vpop.permute.xlu0 %908
  %910 = vrot.lane.b32.xlu0 %v905, 32
  %v911 = vpop.permute.xlu0 %910
  %v914 = vadd.f32 %v146, %v909
  %v915 = vadd.f32 %v149, %v911
  %v916 = vtanh.pop %v914
  %v917 = vtanh.pop %v915
  %v918 = vsub.f32 1.0, %v882
  %v919 = vsub.f32 1.0, %v897
  %922 = vrot.lane.b32.xlu0 %v916, 112
  %v923 = vpop.permute.xlu0 %922
  %924 = vrot.lane.b32.xlu0 %v917, 112
  %v925 = vpop.permute.xlu0 %924
  %v928 = vmul.f32 %v918, %v923
  %v929 = vmul.f32 %v919, %v925
  %v930 = vrot.slane %v822, 7
  %v931 = vrot.slane %v823, 7
  %v934 = vmul.f32 %v882, %v930
  %v935 = vmul.f32 %v897, %v931
  %v936 = vadd.f32 %v928, %v934
  %v937 = vadd.f32 %v929, %v935
  %v940 = vrot.slane %v936, 6
  %v941 = vrot.slane %v937, 5
  %v942 = vsel %vm260, %v941, %v940
  %943 = vrot.lane.b32.xlu0 %v942, 112
  %v944 = vpop.permute.xlu0 %943
  %v945 = vsel %vm121, %v944, 0
  %947 = vmatpush.msra.mxu0 0.0
  %948 = vmatpush.msra.mxu0 0.0
  %949 = vmatpush.msra.mxu0 0.0
  %950 = vmatpush.msra.mxu0 0.0
  %951 = vmatpush.msra.mxu0 0.0
  %952 = vmatpush.msra.mxu0 0.0
  %953 = vmatpush.msra.mxu0 0.0
  %954 = vmatpush.msra.mxu0 0.0
  %955 = vmatpush.msra.mxu0 0.0
  %956 = vmatpush.msra.mxu0 0.0
  %957 = vmatpush.msra.mxu0 0.0
  %958 = vmatpush.msra.mxu0 0.0
  %959 = vmatpush.msra.mxu0 0.0
  %960 = vmatpush.msra.mxu0 0.0
  %961 = vmatpush.msra.mxu0 %v60
  %962 = vmatpush.msra.mxu0 %v59
  %963 = vmatmul.f32.gmra.mxu0 %v945
  %v964 = vpop.f32.mrf.mxu0
  %v965 = vadd.f32 %v152, %v964
  %966 = vdwg.mxu0
  %v968 = vrot.slane %v965, 1
  %v969 = vrot.slane %v965, 2
  %v972 = vadd.f32 %v146, %v968
  %v973 = vadd.f32 %v149, %v969
  %v974 = vxor.u32 %v972, 2147483648
  %v975 = vxor.u32 %v973, 2147483648
  %v976 = vmul.f32 %v974, 1.442695
  %v977 = vpow.pop %v976
  %v978 = vmul.f32 %v975, 1.442695
  %v979 = vpow.pop %v978
  %v980 = vadd.f32 %v977, 1.0
  %v981 = vadd.f32 %v979, 1.0
  %v982 = vrcp.pop %v980
  %v983 = vmul.f32 %v980, %v982
  %v984 = vsub.f32 1.0, %v983
  %v985 = vmul.f32 %v982, %v984
  %v986 = vadd.f32 %v982, %v985
  %vm987 = vweird.f32 %v980
  %vm988 = vweird.f32 %v982
  %vm989 = vmor %vm987, %vm988
  %v990 = vsel %vm989, %v982, %v986
  %v991 = vand.u32 2147483647, %v980
  %vm992 = vcmp.eq.f32.partialorder %v991, 8.507059e+37
  %v993 = vand.u32 %v980, 2147483648
  %v994 = vor.u32 1.1754944e-38, %v993
  %v995 = vsel %vm992, %v994, %v990
  %v996 = vmul.f32 1.0, %v995
  %v997 = vrcp.pop %v981
  %v998 = vmul.f32 %v981, %v997
  %v999 = vsub.f32 1.0, %v998
  %v1000 = vmul.f32 %v997, %v999
  %v1001 = vadd.f32 %v997, %v1000
  %vm1002 = vweird.f32 %v981
  %vm1003 = vweird.f32 %v997
  %vm1004 = vmor %vm1002, %vm1003
  %v1005 = vsel %vm1004, %v997, %v1001
  %v1006 = vand.u32 2147483647, %v981
  %vm1007 = vcmp.eq.f32.partialorder %v1006, 8.507059e+37
  %v1008 = vand.u32 %v981, 2147483648
  %v1009 = vor.u32 1.1754944e-38, %v1008
  %v1010 = vsel %vm1007, %v1009, %v1005
  %v1011 = vmul.f32 1.0, %v1010
  %1012 = vrot.lane.b32.xlu0 %v968, 96
  %v1013 = vpop.permute.xlu0 %1012
  %1014 = vrot.lane.b32.xlu0 %v969, 96
  %v1015 = vpop.permute.xlu0 %1014
  %v1018 = vmul.f32 %v996, %v1013
  %v1019 = vmul.f32 %v1011, %v1015
  %1022 = vrot.lane.b32.xlu0 %v1018, 32
  %v1023 = vpop.permute.xlu0 %1022
  %1024 = vrot.lane.b32.xlu0 %v1019, 32
  %v1025 = vpop.permute.xlu0 %1024
  %v1028 = vadd.f32 %v146, %v1023
  %v1029 = vadd.f32 %v149, %v1025
  %v1030 = vtanh.pop %v1028
  %v1031 = vtanh.pop %v1029
  %v1032 = vsub.f32 1.0, %v996
  %v1033 = vsub.f32 1.0, %v1011
  %1036 = vrot.lane.b32.xlu0 %v1030, 112
  %v1037 = vpop.permute.xlu0 %1036
  %1038 = vrot.lane.b32.xlu0 %v1031, 112
  %v1039 = vpop.permute.xlu0 %1038
  %v1042 = vmul.f32 %v1032, %v1037
  %v1043 = vmul.f32 %v1033, %v1039
  %v1044 = vrot.slane %v936, 7
  %v1045 = vrot.slane %v937, 7
  %v1048 = vmul.f32 %v996, %v1044
  %v1049 = vmul.f32 %v1011, %v1045
  %v1050 = vadd.f32 %v1042, %v1048
  %v1051 = vadd.f32 %v1043, %v1049
  %vm1052 = vcmask 1040384
  %v1053 = vsel %vm1052, %v255, %v367
  %v1054 = vsel %vm1052, %v256, %v368
  %vm1055 = vcmask 1041408
  %v1056 = vsel %vm1055, %v1053, %v480
  %v1057 = vsel %vm1055, %v1054, %v481
  %vm1058 = vcmask 1042432
  %v1059 = vsel %vm1058, %v1056, %v594
  %v1060 = vsel %vm1058, %v1057, %v595
  %vm1061 = vcmask 1043456
  %v1062 = vsel %vm1061, %v1059, %v708
  %v1063 = vsel %vm1061, %v1060, %v709
  %vm1064 = vcmask 1044480
  %v1065 = vsel %vm1064, %v1062, %v822
  %v1066 = vsel %vm1064, %v1063, %v823
  %vm1067 = vcmask 1045504
  %v1068 = vsel %vm1067, %v1065, %v936
  %v1069 = vsel %vm1067, %v1066, %v937
  %vm1070 = vcmask 1046528
  %v1071 = vsel %vm1070, %v1068, %v1050
  %v1072 = vsel %vm1070, %v1069, %v1051
  %v1073 = vmul.f32 %v1071, %v40
  %v1074 = vmul.f32 %v1072, %v47
  %1077 = vrot.lane.b32.xlu0 %v1073, 112
  %v1078 = vpop.permute.xlu0 %1077
  %1079 = vrot.lane.b32.xlu0 %v1074, 112
  %v1080 = vpop.permute.xlu0 %1079
  %1083 = vst.msk [vmem:[%s8] sm:$0xff] %vm121, %v1078
  %1084 = vst.msk [vmem:[%s8 + $0x8] sm:$0xff] %vm121, %v1080
  %1085 = vrot.lane.b32.xlu0 %v116, 16
  %v1086 = vpop.permute.xlu0 %1085
  %1087 = vrot.lane.b32.xlu0 %v117, 16
  %v1088 = vpop.permute.xlu0 %1087
  %v1091 = vmul.f32 %v1073, %v1086
  %v1092 = vmul.f32 %v1074, %v1088
  %1095 = vrot.lane.b32.xlu0 %v1091, 112
  %v1096 = vpop.permute.xlu0 %1095
  %1097 = vrot.lane.b32.xlu0 %v1092, 112
  %v1098 = vpop.permute.xlu0 %1097
  %v1101 = vsel %vm121, %v1096, 0.0
  %1102 = vadd.xlane.f32.xlu0 %v1101
  %v1103 = vpop.xlane.xlu0 %1102
  %v1104 = vsel %vm121, %v1098, 0.0
  %1105 = vadd.xlane.f32.xlu0 %v1104
  %v1106 = vpop.xlane.xlu0 %1105
  %v1109 = vlaneseq
  %v1110 = vand.u32 %v1109, 127
  %v1111 = vperm.slane %v1103, %v1110
  %v1112 = vperm.slane %v1106, %v1110
  %v1113 = vsel %vm260, %v1112, %v1111
  %vm1115 = vcmask 58368
  %1116 = vst.msk [vmem:[%s9] sm:$0x3] %vm1115, %v1113
  %s1117 = scalar_lea.vmem %s1, 64
  %v1118 = vld [vmem:[%s1117] sm:$0xff]
  %v1119 = vld [vmem:[%s1117 + $0x8] sm:$0xff]
  %v1120 = vld [vmem:[%s1117 + $0x10] sm:$0xff]
  %v1121 = vld [vmem:[%s1117 + $0x18] sm:$0xff]
  %v1122 = vld [vmem:[%s1117 + $0x20] sm:$0xff]
  %v1123 = vld [vmem:[%s1117 + $0x28] sm:$0xff]
  %v1124 = vld [vmem:[%s1117 + $0x30] sm:$0xff]
  %v1125 = vld [vmem:[%s1117 + $0x38] sm:$0xff]
  %s1126 = scalar_lea.vmem %s2, 2
  %v1127 = vld [vmem:[%s1126] sm:$0x3]
  %s1128 = scalar_lea.vmem %s3, 16
  %v1129 = vld [vmem:[%s1128] sm:$0xff]
  %v1130 = vld [vmem:[%s1128 + $0x8] sm:$0xff]
  %s1131 = scalar_lea.vmem %s4, 16
  %v1132 = vld [vmem:[%s1131] sm:$0xff]
  %v1133 = vld [vmem:[%s1131 + $0x8] sm:$0xff]
  %s1134 = scalar_lea.vmem %s5, 1
  %v1135 = vld [vmem:[%s1134] sm:$0x1]
  %s1136 = scalar_lea.vmem %s6, 1
  %v1137 = vld [vmem:[%s1136] sm:$0x1]
  %v1139 = vrot.slane %v1127, 1
  %v1140 = vperm.slane %v1127, 0
  %v1141 = vperm.slane %v1139, 0
  %1144 = vmatpush.msra.mxu0 0.0
  %1145 = vmatpush.msra.mxu0 0.0
  %1146 = vmatpush.msra.mxu0 0.0
  %1147 = vmatpush.msra.mxu0 0.0
  %1148 = vmatpush.msra.mxu0 0.0
  %1149 = vmatpush.msra.mxu0 0.0
  %1150 = vmatpush.msra.mxu0 0.0
  %1151 = vmatpush.msra.mxu0 0.0
  %1152 = vmatpush.msra.mxu0 0.0
  %1153 = vmatpush.msra.mxu0 0.0
  %1154 = vmatpush.msra.mxu0 0.0
  %1155 = vmatpush.msra.mxu0 0.0
  %1156 = vmatpush.msra.mxu0 %v1121
  %1157 = vmatpush.msra.mxu0 %v1120
  %1158 = vmatpush.msra.mxu0 %v1119
  %1159 = vmatpush.msra.mxu0 %v1118
  %1160 = vmatmul.f32.gmra.mxu0 %v71
  %v1161 = vpop.f32.mrf.mxu0
  %v1162 = vadd.f32 %v1140, %v1161
  %1163 = vdwg.mxu0
  %1164 = vmatpush.msra.mxu0 0.0
  %1165 = vmatpush.msra.mxu0 0.0
  %1166 = vmatpush.msra.mxu0 0.0
  %1167 = vmatpush.msra.mxu0 0.0
  %1168 = vmatpush.msra.mxu0 0.0
  %1169 = vmatpush.msra.mxu0 0.0
  %1170 = vmatpush.msra.mxu0 0.0
  %1171 = vmatpush.msra.mxu0 0.0
  %1172 = vmatpush.msra.mxu0 0.0
  %1173 = vmatpush.msra.mxu0 0.0
  %1174 = vmatpush.msra.mxu0 0.0
  %1175 = vmatpush.msra.mxu0 0.0
  %1176 = vmatpush.msra.mxu0 %v1125
  %1177 = vmatpush.msra.mxu0 %v1124
  %1178 = vmatpush.msra.mxu0 %v1123
  %1179 = vmatpush.msra.mxu0 %v1122
  %1180 = vmatmul.f32.gmra.mxu0 %v94
  %v1181 = vpop.f32.mrf.mxu0
  %v1182 = vadd.f32 %v1141, %v1181
  %1183 = vdwg.mxu0
  %v1184 = vtanh.pop %v1162
  %v1185 = vtanh.pop %v1182
  %v1187 = vperm.slane %v1135, 0
  %v1190 = vsel %vm121, %v1184, 0
  %v1193 = vsel %vm121, %v1185, 0
  %1195 = vmatpush.msra.mxu0 0.0
  %1196 = vmatpush.msra.mxu0 0.0
  %1197 = vmatpush.msra.mxu0 0.0
  %1198 = vmatpush.msra.mxu0 0.0
  %1199 = vmatpush.msra.mxu0 0.0
  %1200 = vmatpush.msra.mxu0 0.0
  %1201 = vmatpush.msra.mxu0 0.0
  %1202 = vmatpush.msra.mxu0 0.0
  %1203 = vmatpush.msra.mxu0 0.0
  %1204 = vmatpush.msra.mxu0 0.0
  %1205 = vmatpush.msra.mxu0 0.0
  %1206 = vmatpush.msra.mxu0 0.0
  %1207 = vmatpush.msra.mxu0 0.0
  %1208 = vmatpush.msra.mxu0 0.0
  %1209 = vmatpush.msra.mxu0 %v1130
  %1210 = vmatpush.msra.mxu0 %v1129
  %1211 = vmatmul.f32.gmra.mxu0 %v1190
  %v1212 = vpop.f32.mrf.mxu0
  %v1213 = vadd.f32 %v1187, %v1212
  %1214 = vmatmul.f32.gmra.mxu0 %v1193
  %v1215 = vpop.f32.mrf.mxu0
  %v1216 = vadd.f32 %v1187, %v1215
  %1217 = vdwg.mxu0
  %v1219 = vperm.slane %v1137, 0
  %1221 = vmatpush.msra.mxu0 0.0
  %1222 = vmatpush.msra.mxu0 0.0
  %1223 = vmatpush.msra.mxu0 0.0
  %1224 = vmatpush.msra.mxu0 0.0
  %1225 = vmatpush.msra.mxu0 0.0
  %1226 = vmatpush.msra.mxu0 0.0
  %1227 = vmatpush.msra.mxu0 0.0
  %1228 = vmatpush.msra.mxu0 0.0
  %1229 = vmatpush.msra.mxu0 0.0
  %1230 = vmatpush.msra.mxu0 0.0
  %1231 = vmatpush.msra.mxu0 0.0
  %1232 = vmatpush.msra.mxu0 0.0
  %1233 = vmatpush.msra.mxu0 0.0
  %1234 = vmatpush.msra.mxu0 0.0
  %1235 = vmatpush.msra.mxu0 %v1133
  %1236 = vmatpush.msra.mxu0 %v1132
  %1237 = vmatmul.f32.gmra.mxu0 %v155
  %v1238 = vpop.f32.mrf.mxu0
  %v1239 = vadd.f32 %v1219, %v1238
  %1240 = vdwg.mxu0
  %v1242 = vrot.slane %v1239, 1
  %v1245 = vadd.f32 %v1213, %v1239
  %v1246 = vadd.f32 %v1216, %v1242
  %v1247 = vxor.u32 %v1245, 2147483648
  %v1248 = vxor.u32 %v1246, 2147483648
  %v1249 = vmul.f32 %v1247, 1.442695
  %v1250 = vpow.pop %v1249
  %v1251 = vmul.f32 %v1248, 1.442695
  %v1252 = vpow.pop %v1251
  %v1253 = vadd.f32 %v1250, 1.0
  %v1254 = vadd.f32 %v1252, 1.0
  %v1255 = vrcp.pop %v1253
  %v1256 = vmul.f32 %v1253, %v1255
  %v1257 = vsub.f32 1.0, %v1256
  %v1258 = vmul.f32 %v1255, %v1257
  %v1259 = vadd.f32 %v1255, %v1258
  %vm1260 = vweird.f32 %v1253
  %vm1261 = vweird.f32 %v1255
  %vm1262 = vmor %vm1260, %vm1261
  %v1263 = vsel %vm1262, %v1255, %v1259
  %v1264 = vand.u32 2147483647, %v1253
  %vm1265 = vcmp.eq.f32.partialorder %v1264, 8.507059e+37
  %v1266 = vand.u32 %v1253, 2147483648
  %v1267 = vor.u32 1.1754944e-38, %v1266
  %v1268 = vsel %vm1265, %v1267, %v1263
  %v1269 = vmul.f32 1.0, %v1268
  %v1270 = vrcp.pop %v1254
  %v1271 = vmul.f32 %v1254, %v1270
  %v1272 = vsub.f32 1.0, %v1271
  %v1273 = vmul.f32 %v1270, %v1272
  %v1274 = vadd.f32 %v1270, %v1273
  %vm1275 = vweird.f32 %v1254
  %vm1276 = vweird.f32 %v1270
  %vm1277 = vmor %vm1275, %vm1276
  %v1278 = vsel %vm1277, %v1270, %v1274
  %v1279 = vand.u32 2147483647, %v1254
  %vm1280 = vcmp.eq.f32.partialorder %v1279, 8.507059e+37
  %v1281 = vand.u32 %v1254, 2147483648
  %v1282 = vor.u32 1.1754944e-38, %v1281
  %v1283 = vsel %vm1280, %v1282, %v1278
  %v1284 = vmul.f32 1.0, %v1283
  %1285 = vrot.lane.b32.xlu0 %v1239, 96
  %v1286 = vpop.permute.xlu0 %1285
  %1287 = vrot.lane.b32.xlu0 %v1242, 96
  %v1288 = vpop.permute.xlu0 %1287
  %v1291 = vmul.f32 %v1269, %v1286
  %v1292 = vmul.f32 %v1284, %v1288
  %1295 = vrot.lane.b32.xlu0 %v1291, 32
  %v1296 = vpop.permute.xlu0 %1295
  %1297 = vrot.lane.b32.xlu0 %v1292, 32
  %v1298 = vpop.permute.xlu0 %1297
  %v1301 = vadd.f32 %v1213, %v1296
  %v1302 = vadd.f32 %v1216, %v1298
  %v1303 = vtanh.pop %v1301
  %v1304 = vtanh.pop %v1302
  %v1305 = vsub.f32 1.0, %v1269
  %v1306 = vsub.f32 1.0, %v1284
  %1309 = vrot.lane.b32.xlu0 %v1303, 112
  %v1310 = vpop.permute.xlu0 %1309
  %1311 = vrot.lane.b32.xlu0 %v1304, 112
  %v1312 = vpop.permute.xlu0 %1311
  %v1315 = vmul.f32 %v1305, %v1310
  %v1316 = vmul.f32 %v1306, %v1312
  %v1317 = vmul.f32 %v1269, 0.0
  %v1318 = vmul.f32 %v1284, 0.0
  %v1319 = vadd.f32 %v1315, %v1317
  %v1320 = vadd.f32 %v1316, %v1318
  %v1323 = vrot.slane %v1320, 7
  %v1324 = vsel %vm260, %v1323, %v1319
  %1325 = vrot.lane.b32.xlu0 %v1324, 112
  %v1326 = vpop.permute.xlu0 %1325
  %v1327 = vsel %vm121, %v1326, 0
  %1329 = vmatpush.msra.mxu0 0.0
  %1330 = vmatpush.msra.mxu0 0.0
  %1331 = vmatpush.msra.mxu0 0.0
  %1332 = vmatpush.msra.mxu0 0.0
  %1333 = vmatpush.msra.mxu0 0.0
  %1334 = vmatpush.msra.mxu0 0.0
  %1335 = vmatpush.msra.mxu0 0.0
  %1336 = vmatpush.msra.mxu0 0.0
  %1337 = vmatpush.msra.mxu0 0.0
  %1338 = vmatpush.msra.mxu0 0.0
  %1339 = vmatpush.msra.mxu0 0.0
  %1340 = vmatpush.msra.mxu0 0.0
  %1341 = vmatpush.msra.mxu0 0.0
  %1342 = vmatpush.msra.mxu0 0.0
  %1343 = vmatpush.msra.mxu0 %v1133
  %1344 = vmatpush.msra.mxu0 %v1132
  %1345 = vmatmul.f32.gmra.mxu0 %v1327
  %v1346 = vpop.f32.mrf.mxu0
  %v1347 = vadd.f32 %v1219, %v1346
  %1348 = vdwg.mxu0
  %v1350 = vrot.slane %v1347, 7
  %v1353 = vadd.f32 %v1213, %v1350
  %v1354 = vadd.f32 %v1216, %v1347
  %v1355 = vxor.u32 %v1353, 2147483648
  %v1356 = vxor.u32 %v1354, 2147483648
  %v1357 = vmul.f32 %v1355, 1.442695
  %v1358 = vpow.pop %v1357
  %v1359 = vmul.f32 %v1356, 1.442695
  %v1360 = vpow.pop %v1359
  %v1361 = vadd.f32 %v1358, 1.0
  %v1362 = vadd.f32 %v1360, 1.0
  %v1363 = vrcp.pop %v1361
  %v1364 = vmul.f32 %v1361, %v1363
  %v1365 = vsub.f32 1.0, %v1364
  %v1366 = vmul.f32 %v1363, %v1365
  %v1367 = vadd.f32 %v1363, %v1366
  %vm1368 = vweird.f32 %v1361
  %vm1369 = vweird.f32 %v1363
  %vm1370 = vmor %vm1368, %vm1369
  %v1371 = vsel %vm1370, %v1363, %v1367
  %v1372 = vand.u32 2147483647, %v1361
  %vm1373 = vcmp.eq.f32.partialorder %v1372, 8.507059e+37
  %v1374 = vand.u32 %v1361, 2147483648
  %v1375 = vor.u32 1.1754944e-38, %v1374
  %v1376 = vsel %vm1373, %v1375, %v1371
  %v1377 = vmul.f32 1.0, %v1376
  %v1378 = vrcp.pop %v1362
  %v1379 = vmul.f32 %v1362, %v1378
  %v1380 = vsub.f32 1.0, %v1379
  %v1381 = vmul.f32 %v1378, %v1380
  %v1382 = vadd.f32 %v1378, %v1381
  %vm1383 = vweird.f32 %v1362
  %vm1384 = vweird.f32 %v1378
  %vm1385 = vmor %vm1383, %vm1384
  %v1386 = vsel %vm1385, %v1378, %v1382
  %v1387 = vand.u32 2147483647, %v1362
  %vm1388 = vcmp.eq.f32.partialorder %v1387, 8.507059e+37
  %v1389 = vand.u32 %v1362, 2147483648
  %v1390 = vor.u32 1.1754944e-38, %v1389
  %v1391 = vsel %vm1388, %v1390, %v1386
  %v1392 = vmul.f32 1.0, %v1391
  %1393 = vrot.lane.b32.xlu0 %v1350, 96
  %v1394 = vpop.permute.xlu0 %1393
  %1395 = vrot.lane.b32.xlu0 %v1347, 96
  %v1396 = vpop.permute.xlu0 %1395
  %v1399 = vmul.f32 %v1377, %v1394
  %v1400 = vmul.f32 %v1392, %v1396
  %1403 = vrot.lane.b32.xlu0 %v1399, 32
  %v1404 = vpop.permute.xlu0 %1403
  %1405 = vrot.lane.b32.xlu0 %v1400, 32
  %v1406 = vpop.permute.xlu0 %1405
  %v1409 = vadd.f32 %v1213, %v1404
  %v1410 = vadd.f32 %v1216, %v1406
  %v1411 = vtanh.pop %v1409
  %v1412 = vtanh.pop %v1410
  %v1413 = vsub.f32 1.0, %v1377
  %v1414 = vsub.f32 1.0, %v1392
  %1417 = vrot.lane.b32.xlu0 %v1411, 112
  %v1418 = vpop.permute.xlu0 %1417
  %1419 = vrot.lane.b32.xlu0 %v1412, 112
  %v1420 = vpop.permute.xlu0 %1419
  %v1423 = vmul.f32 %v1413, %v1418
  %v1424 = vmul.f32 %v1414, %v1420
  %v1425 = vrot.slane %v1319, 7
  %v1428 = vmul.f32 %v1377, %v1425
  %v1429 = vmul.f32 %v1392, %v1323
  %v1430 = vadd.f32 %v1423, %v1428
  %v1431 = vadd.f32 %v1424, %v1429
  %v1434 = vrot.slane %v1430, 1
  %v1435 = vsel %vm260, %v1431, %v1434
  %1436 = vrot.lane.b32.xlu0 %v1435, 112
  %v1437 = vpop.permute.xlu0 %1436
  %v1438 = vsel %vm121, %v1437, 0
  %1440 = vmatpush.msra.mxu0 0.0
  %1441 = vmatpush.msra.mxu0 0.0
  %1442 = vmatpush.msra.mxu0 0.0
  %1443 = vmatpush.msra.mxu0 0.0
  %1444 = vmatpush.msra.mxu0 0.0
  %1445 = vmatpush.msra.mxu0 0.0
  %1446 = vmatpush.msra.mxu0 0.0
  %1447 = vmatpush.msra.mxu0 0.0
  %1448 = vmatpush.msra.mxu0 0.0
  %1449 = vmatpush.msra.mxu0 0.0
  %1450 = vmatpush.msra.mxu0 0.0
  %1451 = vmatpush.msra.mxu0 0.0
  %1452 = vmatpush.msra.mxu0 0.0
  %1453 = vmatpush.msra.mxu0 0.0
  %1454 = vmatpush.msra.mxu0 %v1133
  %1455 = vmatpush.msra.mxu0 %v1132
  %1456 = vmatmul.f32.gmra.mxu0 %v1438
  %v1457 = vpop.f32.mrf.mxu0
  %v1458 = vadd.f32 %v1219, %v1457
  %1459 = vdwg.mxu0
  %v1461 = vrot.slane %v1458, 6
  %v1462 = vrot.slane %v1458, 7
  %v1465 = vadd.f32 %v1213, %v1461
  %v1466 = vadd.f32 %v1216, %v1462
  %v1467 = vxor.u32 %v1465, 2147483648
  %v1468 = vxor.u32 %v1466, 2147483648
  %v1469 = vmul.f32 %v1467, 1.442695
  %v1470 = vpow.pop %v1469
  %v1471 = vmul.f32 %v1468, 1.442695
  %v1472 = vpow.pop %v1471
  %v1473 = vadd.f32 %v1470, 1.0
  %v1474 = vadd.f32 %v1472, 1.0
  %v1475 = vrcp.pop %v1473
  %v1476 = vmul.f32 %v1473, %v1475
  %v1477 = vsub.f32 1.0, %v1476
  %v1478 = vmul.f32 %v1475, %v1477
  %v1479 = vadd.f32 %v1475, %v1478
  %vm1480 = vweird.f32 %v1473
  %vm1481 = vweird.f32 %v1475
  %vm1482 = vmor %vm1480, %vm1481
  %v1483 = vsel %vm1482, %v1475, %v1479
  %v1484 = vand.u32 2147483647, %v1473
  %vm1485 = vcmp.eq.f32.partialorder %v1484, 8.507059e+37
  %v1486 = vand.u32 %v1473, 2147483648
  %v1487 = vor.u32 1.1754944e-38, %v1486
  %v1488 = vsel %vm1485, %v1487, %v1483
  %v1489 = vmul.f32 1.0, %v1488
  %v1490 = vrcp.pop %v1474
  %v1491 = vmul.f32 %v1474, %v1490
  %v1492 = vsub.f32 1.0, %v1491
  %v1493 = vmul.f32 %v1490, %v1492
  %v1494 = vadd.f32 %v1490, %v1493
  %vm1495 = vweird.f32 %v1474
  %vm1496 = vweird.f32 %v1490
  %vm1497 = vmor %vm1495, %vm1496
  %v1498 = vsel %vm1497, %v1490, %v1494
  %v1499 = vand.u32 2147483647, %v1474
  %vm1500 = vcmp.eq.f32.partialorder %v1499, 8.507059e+37
  %v1501 = vand.u32 %v1474, 2147483648
  %v1502 = vor.u32 1.1754944e-38, %v1501
  %v1503 = vsel %vm1500, %v1502, %v1498
  %v1504 = vmul.f32 1.0, %v1503
  %1505 = vrot.lane.b32.xlu0 %v1461, 96
  %v1506 = vpop.permute.xlu0 %1505
  %1507 = vrot.lane.b32.xlu0 %v1462, 96
  %v1508 = vpop.permute.xlu0 %1507
  %v1511 = vmul.f32 %v1489, %v1506
  %v1512 = vmul.f32 %v1504, %v1508
  %1515 = vrot.lane.b32.xlu0 %v1511, 32
  %v1516 = vpop.permute.xlu0 %1515
  %1517 = vrot.lane.b32.xlu0 %v1512, 32
  %v1518 = vpop.permute.xlu0 %1517
  %v1521 = vadd.f32 %v1213, %v1516
  %v1522 = vadd.f32 %v1216, %v1518
  %v1523 = vtanh.pop %v1521
  %v1524 = vtanh.pop %v1522
  %v1525 = vsub.f32 1.0, %v1489
  %v1526 = vsub.f32 1.0, %v1504
  %1529 = vrot.lane.b32.xlu0 %v1523, 112
  %v1530 = vpop.permute.xlu0 %1529
  %1531 = vrot.lane.b32.xlu0 %v1524, 112
  %v1532 = vpop.permute.xlu0 %1531
  %v1535 = vmul.f32 %v1525, %v1530
  %v1536 = vmul.f32 %v1526, %v1532
  %v1537 = vrot.slane %v1430, 7
  %v1538 = vrot.slane %v1431, 7
  %v1541 = vmul.f32 %v1489, %v1537
  %v1542 = vmul.f32 %v1504, %v1538
  %v1543 = vadd.f32 %v1535, %v1541
  %v1544 = vadd.f32 %v1536, %v1542
  %v1547 = vrot.slane %v1543, 2
  %v1548 = vrot.slane %v1544, 1
  %v1549 = vsel %vm260, %v1548, %v1547
  %1550 = vrot.lane.b32.xlu0 %v1549, 112
  %v1551 = vpop.permute.xlu0 %1550
  %v1552 = vsel %vm121, %v1551, 0
  %1554 = vmatpush.msra.mxu0 0.0
  %1555 = vmatpush.msra.mxu0 0.0
  %1556 = vmatpush.msra.mxu0 0.0
  %1557 = vmatpush.msra.mxu0 0.0
  %1558 = vmatpush.msra.mxu0 0.0
  %1559 = vmatpush.msra.mxu0 0.0
  %1560 = vmatpush.msra.mxu0 0.0
  %1561 = vmatpush.msra.mxu0 0.0
  %1562 = vmatpush.msra.mxu0 0.0
  %1563 = vmatpush.msra.mxu0 0.0
  %1564 = vmatpush.msra.mxu0 0.0
  %1565 = vmatpush.msra.mxu0 0.0
  %1566 = vmatpush.msra.mxu0 0.0
  %1567 = vmatpush.msra.mxu0 0.0
  %1568 = vmatpush.msra.mxu0 %v1133
  %1569 = vmatpush.msra.mxu0 %v1132
  %1570 = vmatmul.f32.gmra.mxu0 %v1552
  %v1571 = vpop.f32.mrf.mxu0
  %v1572 = vadd.f32 %v1219, %v1571
  %1573 = vdwg.mxu0
  %v1575 = vrot.slane %v1572, 5
  %v1576 = vrot.slane %v1572, 6
  %v1579 = vadd.f32 %v1213, %v1575
  %v1580 = vadd.f32 %v1216, %v1576
  %v1581 = vxor.u32 %v1579, 2147483648
  %v1582 = vxor.u32 %v1580, 2147483648
  %v1583 = vmul.f32 %v1581, 1.442695
  %v1584 = vpow.pop %v1583
  %v1585 = vmul.f32 %v1582, 1.442695
  %v1586 = vpow.pop %v1585
  %v1587 = vadd.f32 %v1584, 1.0
  %v1588 = vadd.f32 %v1586, 1.0
  %v1589 = vrcp.pop %v1587
  %v1590 = vmul.f32 %v1587, %v1589
  %v1591 = vsub.f32 1.0, %v1590
  %v1592 = vmul.f32 %v1589, %v1591
  %v1593 = vadd.f32 %v1589, %v1592
  %vm1594 = vweird.f32 %v1587
  %vm1595 = vweird.f32 %v1589
  %vm1596 = vmor %vm1594, %vm1595
  %v1597 = vsel %vm1596, %v1589, %v1593
  %v1598 = vand.u32 2147483647, %v1587
  %vm1599 = vcmp.eq.f32.partialorder %v1598, 8.507059e+37
  %v1600 = vand.u32 %v1587, 2147483648
  %v1601 = vor.u32 1.1754944e-38, %v1600
  %v1602 = vsel %vm1599, %v1601, %v1597
  %v1603 = vmul.f32 1.0, %v1602
  %v1604 = vrcp.pop %v1588
  %v1605 = vmul.f32 %v1588, %v1604
  %v1606 = vsub.f32 1.0, %v1605
  %v1607 = vmul.f32 %v1604, %v1606
  %v1608 = vadd.f32 %v1604, %v1607
  %vm1609 = vweird.f32 %v1588
  %vm1610 = vweird.f32 %v1604
  %vm1611 = vmor %vm1609, %vm1610
  %v1612 = vsel %vm1611, %v1604, %v1608
  %v1613 = vand.u32 2147483647, %v1588
  %vm1614 = vcmp.eq.f32.partialorder %v1613, 8.507059e+37
  %v1615 = vand.u32 %v1588, 2147483648
  %v1616 = vor.u32 1.1754944e-38, %v1615
  %v1617 = vsel %vm1614, %v1616, %v1612
  %v1618 = vmul.f32 1.0, %v1617
  %1619 = vrot.lane.b32.xlu0 %v1575, 96
  %v1620 = vpop.permute.xlu0 %1619
  %1621 = vrot.lane.b32.xlu0 %v1576, 96
  %v1622 = vpop.permute.xlu0 %1621
  %v1625 = vmul.f32 %v1603, %v1620
  %v1626 = vmul.f32 %v1618, %v1622
  %1629 = vrot.lane.b32.xlu0 %v1625, 32
  %v1630 = vpop.permute.xlu0 %1629
  %1631 = vrot.lane.b32.xlu0 %v1626, 32
  %v1632 = vpop.permute.xlu0 %1631
  %v1635 = vadd.f32 %v1213, %v1630
  %v1636 = vadd.f32 %v1216, %v1632
  %v1637 = vtanh.pop %v1635
  %v1638 = vtanh.pop %v1636
  %v1639 = vsub.f32 1.0, %v1603
  %v1640 = vsub.f32 1.0, %v1618
  %1643 = vrot.lane.b32.xlu0 %v1637, 112
  %v1644 = vpop.permute.xlu0 %1643
  %1645 = vrot.lane.b32.xlu0 %v1638, 112
  %v1646 = vpop.permute.xlu0 %1645
  %v1649 = vmul.f32 %v1639, %v1644
  %v1650 = vmul.f32 %v1640, %v1646
  %v1651 = vrot.slane %v1543, 7
  %v1652 = vrot.slane %v1544, 7
  %v1655 = vmul.f32 %v1603, %v1651
  %v1656 = vmul.f32 %v1618, %v1652
  %v1657 = vadd.f32 %v1649, %v1655
  %v1658 = vadd.f32 %v1650, %v1656
  %v1661 = vrot.slane %v1657, 3
  %v1662 = vrot.slane %v1658, 2
  %v1663 = vsel %vm260, %v1662, %v1661
  %1664 = vrot.lane.b32.xlu0 %v1663, 112
  %v1665 = vpop.permute.xlu0 %1664
  %v1666 = vsel %vm121, %v1665, 0
  %1668 = vmatpush.msra.mxu0 0.0
  %1669 = vmatpush.msra.mxu0 0.0
  %1670 = vmatpush.msra.mxu0 0.0
  %1671 = vmatpush.msra.mxu0 0.0
  %1672 = vmatpush.msra.mxu0 0.0
  %1673 = vmatpush.msra.mxu0 0.0
  %1674 = vmatpush.msra.mxu0 0.0
  %1675 = vmatpush.msra.mxu0 0.0
  %1676 = vmatpush.msra.mxu0 0.0
  %1677 = vmatpush.msra.mxu0 0.0
  %1678 = vmatpush.msra.mxu0 0.0
  %1679 = vmatpush.msra.mxu0 0.0
  %1680 = vmatpush.msra.mxu0 0.0
  %1681 = vmatpush.msra.mxu0 0.0
  %1682 = vmatpush.msra.mxu0 %v1133
  %1683 = vmatpush.msra.mxu0 %v1132
  %1684 = vmatmul.f32.gmra.mxu0 %v1666
  %v1685 = vpop.f32.mrf.mxu0
  %v1686 = vadd.f32 %v1219, %v1685
  %1687 = vdwg.mxu0
  %v1689 = vrot.slane %v1686, 4
  %v1690 = vrot.slane %v1686, 5
  %v1693 = vadd.f32 %v1213, %v1689
  %v1694 = vadd.f32 %v1216, %v1690
  %v1695 = vxor.u32 %v1693, 2147483648
  %v1696 = vxor.u32 %v1694, 2147483648
  %v1697 = vmul.f32 %v1695, 1.442695
  %v1698 = vpow.pop %v1697
  %v1699 = vmul.f32 %v1696, 1.442695
  %v1700 = vpow.pop %v1699
  %v1701 = vadd.f32 %v1698, 1.0
  %v1702 = vadd.f32 %v1700, 1.0
  %v1703 = vrcp.pop %v1701
  %v1704 = vmul.f32 %v1701, %v1703
  %v1705 = vsub.f32 1.0, %v1704
  %v1706 = vmul.f32 %v1703, %v1705
  %v1707 = vadd.f32 %v1703, %v1706
  %vm1708 = vweird.f32 %v1701
  %vm1709 = vweird.f32 %v1703
  %vm1710 = vmor %vm1708, %vm1709
  %v1711 = vsel %vm1710, %v1703, %v1707
  %v1712 = vand.u32 2147483647, %v1701
  %vm1713 = vcmp.eq.f32.partialorder %v1712, 8.507059e+37
  %v1714 = vand.u32 %v1701, 2147483648
  %v1715 = vor.u32 1.1754944e-38, %v1714
  %v1716 = vsel %vm1713, %v1715, %v1711
  %v1717 = vmul.f32 1.0, %v1716
  %v1718 = vrcp.pop %v1702
  %v1719 = vmul.f32 %v1702, %v1718
  %v1720 = vsub.f32 1.0, %v1719
  %v1721 = vmul.f32 %v1718, %v1720
  %v1722 = vadd.f32 %v1718, %v1721
  %vm1723 = vweird.f32 %v1702
  %vm1724 = vweird.f32 %v1718
  %vm1725 = vmor %vm1723, %vm1724
  %v1726 = vsel %vm1725, %v1718, %v1722
  %v1727 = vand.u32 2147483647, %v1702
  %vm1728 = vcmp.eq.f32.partialorder %v1727, 8.507059e+37
  %v1729 = vand.u32 %v1702, 2147483648
  %v1730 = vor.u32 1.1754944e-38, %v1729
  %v1731 = vsel %vm1728, %v1730, %v1726
  %v1732 = vmul.f32 1.0, %v1731
  %1733 = vrot.lane.b32.xlu0 %v1689, 96
  %v1734 = vpop.permute.xlu0 %1733
  %1735 = vrot.lane.b32.xlu0 %v1690, 96
  %v1736 = vpop.permute.xlu0 %1735
  %v1739 = vmul.f32 %v1717, %v1734
  %v1740 = vmul.f32 %v1732, %v1736
  %1743 = vrot.lane.b32.xlu0 %v1739, 32
  %v1744 = vpop.permute.xlu0 %1743
  %1745 = vrot.lane.b32.xlu0 %v1740, 32
  %v1746 = vpop.permute.xlu0 %1745
  %v1749 = vadd.f32 %v1213, %v1744
  %v1750 = vadd.f32 %v1216, %v1746
  %v1751 = vtanh.pop %v1749
  %v1752 = vtanh.pop %v1750
  %v1753 = vsub.f32 1.0, %v1717
  %v1754 = vsub.f32 1.0, %v1732
  %1757 = vrot.lane.b32.xlu0 %v1751, 112
  %v1758 = vpop.permute.xlu0 %1757
  %1759 = vrot.lane.b32.xlu0 %v1752, 112
  %v1760 = vpop.permute.xlu0 %1759
  %v1763 = vmul.f32 %v1753, %v1758
  %v1764 = vmul.f32 %v1754, %v1760
  %v1765 = vrot.slane %v1657, 7
  %v1766 = vrot.slane %v1658, 7
  %v1769 = vmul.f32 %v1717, %v1765
  %v1770 = vmul.f32 %v1732, %v1766
  %v1771 = vadd.f32 %v1763, %v1769
  %v1772 = vadd.f32 %v1764, %v1770
  %v1775 = vrot.slane %v1771, 4
  %v1776 = vrot.slane %v1772, 3
  %v1777 = vsel %vm260, %v1776, %v1775
  %1778 = vrot.lane.b32.xlu0 %v1777, 112
  %v1779 = vpop.permute.xlu0 %1778
  %v1780 = vsel %vm121, %v1779, 0
  %1782 = vmatpush.msra.mxu0 0.0
  %1783 = vmatpush.msra.mxu0 0.0
  %1784 = vmatpush.msra.mxu0 0.0
  %1785 = vmatpush.msra.mxu0 0.0
  %1786 = vmatpush.msra.mxu0 0.0
  %1787 = vmatpush.msra.mxu0 0.0
  %1788 = vmatpush.msra.mxu0 0.0
  %1789 = vmatpush.msra.mxu0 0.0
  %1790 = vmatpush.msra.mxu0 0.0
  %1791 = vmatpush.msra.mxu0 0.0
  %1792 = vmatpush.msra.mxu0 0.0
  %1793 = vmatpush.msra.mxu0 0.0
  %1794 = vmatpush.msra.mxu0 0.0
  %1795 = vmatpush.msra.mxu0 0.0
  %1796 = vmatpush.msra.mxu0 %v1133
  %1797 = vmatpush.msra.mxu0 %v1132
  %1798 = vmatmul.f32.gmra.mxu0 %v1780
  %v1799 = vpop.f32.mrf.mxu0
  %v1800 = vadd.f32 %v1219, %v1799
  %1801 = vdwg.mxu0
  %v1803 = vrot.slane %v1800, 3
  %v1804 = vrot.slane %v1800, 4
  %v1807 = vadd.f32 %v1213, %v1803
  %v1808 = vadd.f32 %v1216, %v1804
  %v1809 = vxor.u32 %v1807, 2147483648
  %v1810 = vxor.u32 %v1808, 2147483648
  %v1811 = vmul.f32 %v1809, 1.442695
  %v1812 = vpow.pop %v1811
  %v1813 = vmul.f32 %v1810, 1.442695
  %v1814 = vpow.pop %v1813
  %v1815 = vadd.f32 %v1812, 1.0
  %v1816 = vadd.f32 %v1814, 1.0
  %v1817 = vrcp.pop %v1815
  %v1818 = vmul.f32 %v1815, %v1817
  %v1819 = vsub.f32 1.0, %v1818
  %v1820 = vmul.f32 %v1817, %v1819
  %v1821 = vadd.f32 %v1817, %v1820
  %vm1822 = vweird.f32 %v1815
  %vm1823 = vweird.f32 %v1817
  %vm1824 = vmor %vm1822, %vm1823
  %v1825 = vsel %vm1824, %v1817, %v1821
  %v1826 = vand.u32 2147483647, %v1815
  %vm1827 = vcmp.eq.f32.partialorder %v1826, 8.507059e+37
  %v1828 = vand.u32 %v1815, 2147483648
  %v1829 = vor.u32 1.1754944e-38, %v1828
  %v1830 = vsel %vm1827, %v1829, %v1825
  %v1831 = vmul.f32 1.0, %v1830
  %v1832 = vrcp.pop %v1816
  %v1833 = vmul.f32 %v1816, %v1832
  %v1834 = vsub.f32 1.0, %v1833
  %v1835 = vmul.f32 %v1832, %v1834
  %v1836 = vadd.f32 %v1832, %v1835
  %vm1837 = vweird.f32 %v1816
  %vm1838 = vweird.f32 %v1832
  %vm1839 = vmor %vm1837, %vm1838
  %v1840 = vsel %vm1839, %v1832, %v1836
  %v1841 = vand.u32 2147483647, %v1816
  %vm1842 = vcmp.eq.f32.partialorder %v1841, 8.507059e+37
  %v1843 = vand.u32 %v1816, 2147483648
  %v1844 = vor.u32 1.1754944e-38, %v1843
  %v1845 = vsel %vm1842, %v1844, %v1840
  %v1846 = vmul.f32 1.0, %v1845
  %1847 = vrot.lane.b32.xlu0 %v1803, 96
  %v1848 = vpop.permute.xlu0 %1847
  %1849 = vrot.lane.b32.xlu0 %v1804, 96
  %v1850 = vpop.permute.xlu0 %1849
  %v1853 = vmul.f32 %v1831, %v1848
  %v1854 = vmul.f32 %v1846, %v1850
  %1857 = vrot.lane.b32.xlu0 %v1853, 32
  %v1858 = vpop.permute.xlu0 %1857
  %1859 = vrot.lane.b32.xlu0 %v1854, 32
  %v1860 = vpop.permute.xlu0 %1859
  %v1863 = vadd.f32 %v1213, %v1858
  %v1864 = vadd.f32 %v1216, %v1860
  %v1865 = vtanh.pop %v1863
  %v1866 = vtanh.pop %v1864
  %v1867 = vsub.f32 1.0, %v1831
  %v1868 = vsub.f32 1.0, %v1846
  %1871 = vrot.lane.b32.xlu0 %v1865, 112
  %v1872 = vpop.permute.xlu0 %1871
  %1873 = vrot.lane.b32.xlu0 %v1866, 112
  %v1874 = vpop.permute.xlu0 %1873
  %v1877 = vmul.f32 %v1867, %v1872
  %v1878 = vmul.f32 %v1868, %v1874
  %v1879 = vrot.slane %v1771, 7
  %v1880 = vrot.slane %v1772, 7
  %v1883 = vmul.f32 %v1831, %v1879
  %v1884 = vmul.f32 %v1846, %v1880
  %v1885 = vadd.f32 %v1877, %v1883
  %v1886 = vadd.f32 %v1878, %v1884
  %v1889 = vrot.slane %v1885, 5
  %v1890 = vrot.slane %v1886, 4
  %v1891 = vsel %vm260, %v1890, %v1889
  %1892 = vrot.lane.b32.xlu0 %v1891, 112
  %v1893 = vpop.permute.xlu0 %1892
  %v1894 = vsel %vm121, %v1893, 0
  %1896 = vmatpush.msra.mxu0 0.0
  %1897 = vmatpush.msra.mxu0 0.0
  %1898 = vmatpush.msra.mxu0 0.0
  %1899 = vmatpush.msra.mxu0 0.0
  %1900 = vmatpush.msra.mxu0 0.0
  %1901 = vmatpush.msra.mxu0 0.0
  %1902 = vmatpush.msra.mxu0 0.0
  %1903 = vmatpush.msra.mxu0 0.0
  %1904 = vmatpush.msra.mxu0 0.0
  %1905 = vmatpush.msra.mxu0 0.0
  %1906 = vmatpush.msra.mxu0 0.0
  %1907 = vmatpush.msra.mxu0 0.0
  %1908 = vmatpush.msra.mxu0 0.0
  %1909 = vmatpush.msra.mxu0 0.0
  %1910 = vmatpush.msra.mxu0 %v1133
  %1911 = vmatpush.msra.mxu0 %v1132
  %1912 = vmatmul.f32.gmra.mxu0 %v1894
  %v1913 = vpop.f32.mrf.mxu0
  %v1914 = vadd.f32 %v1219, %v1913
  %1915 = vdwg.mxu0
  %v1917 = vrot.slane %v1914, 2
  %v1918 = vrot.slane %v1914, 3
  %v1921 = vadd.f32 %v1213, %v1917
  %v1922 = vadd.f32 %v1216, %v1918
  %v1923 = vxor.u32 %v1921, 2147483648
  %v1924 = vxor.u32 %v1922, 2147483648
  %v1925 = vmul.f32 %v1923, 1.442695
  %v1926 = vpow.pop %v1925
  %v1927 = vmul.f32 %v1924, 1.442695
  %v1928 = vpow.pop %v1927
  %v1929 = vadd.f32 %v1926, 1.0
  %v1930 = vadd.f32 %v1928, 1.0
  %v1931 = vrcp.pop %v1929
  %v1932 = vmul.f32 %v1929, %v1931
  %v1933 = vsub.f32 1.0, %v1932
  %v1934 = vmul.f32 %v1931, %v1933
  %v1935 = vadd.f32 %v1931, %v1934
  %vm1936 = vweird.f32 %v1929
  %vm1937 = vweird.f32 %v1931
  %vm1938 = vmor %vm1936, %vm1937
  %v1939 = vsel %vm1938, %v1931, %v1935
  %v1940 = vand.u32 2147483647, %v1929
  %vm1941 = vcmp.eq.f32.partialorder %v1940, 8.507059e+37
  %v1942 = vand.u32 %v1929, 2147483648
  %v1943 = vor.u32 1.1754944e-38, %v1942
  %v1944 = vsel %vm1941, %v1943, %v1939
  %v1945 = vmul.f32 1.0, %v1944
  %v1946 = vrcp.pop %v1930
  %v1947 = vmul.f32 %v1930, %v1946
  %v1948 = vsub.f32 1.0, %v1947
  %v1949 = vmul.f32 %v1946, %v1948
  %v1950 = vadd.f32 %v1946, %v1949
  %vm1951 = vweird.f32 %v1930
  %vm1952 = vweird.f32 %v1946
  %vm1953 = vmor %vm1951, %vm1952
  %v1954 = vsel %vm1953, %v1946, %v1950
  %v1955 = vand.u32 2147483647, %v1930
  %vm1956 = vcmp.eq.f32.partialorder %v1955, 8.507059e+37
  %v1957 = vand.u32 %v1930, 2147483648
  %v1958 = vor.u32 1.1754944e-38, %v1957
  %v1959 = vsel %vm1956, %v1958, %v1954
  %v1960 = vmul.f32 1.0, %v1959
  %1961 = vrot.lane.b32.xlu0 %v1917, 96
  %v1962 = vpop.permute.xlu0 %1961
  %1963 = vrot.lane.b32.xlu0 %v1918, 96
  %v1964 = vpop.permute.xlu0 %1963
  %v1967 = vmul.f32 %v1945, %v1962
  %v1968 = vmul.f32 %v1960, %v1964
  %1971 = vrot.lane.b32.xlu0 %v1967, 32
  %v1972 = vpop.permute.xlu0 %1971
  %1973 = vrot.lane.b32.xlu0 %v1968, 32
  %v1974 = vpop.permute.xlu0 %1973
  %v1977 = vadd.f32 %v1213, %v1972
  %v1978 = vadd.f32 %v1216, %v1974
  %v1979 = vtanh.pop %v1977
  %v1980 = vtanh.pop %v1978
  %v1981 = vsub.f32 1.0, %v1945
  %v1982 = vsub.f32 1.0, %v1960
  %1985 = vrot.lane.b32.xlu0 %v1979, 112
  %v1986 = vpop.permute.xlu0 %1985
  %1987 = vrot.lane.b32.xlu0 %v1980, 112
  %v1988 = vpop.permute.xlu0 %1987
  %v1991 = vmul.f32 %v1981, %v1986
  %v1992 = vmul.f32 %v1982, %v1988
  %v1993 = vrot.slane %v1885, 7
  %v1994 = vrot.slane %v1886, 7
  %v1997 = vmul.f32 %v1945, %v1993
  %v1998 = vmul.f32 %v1960, %v1994
  %v1999 = vadd.f32 %v1991, %v1997
  %v2000 = vadd.f32 %v1992, %v1998
  %v2003 = vrot.slane %v1999, 6
  %v2004 = vrot.slane %v2000, 5
  %v2005 = vsel %vm260, %v2004, %v2003
  %2006 = vrot.lane.b32.xlu0 %v2005, 112
  %v2007 = vpop.permute.xlu0 %2006
  %v2008 = vsel %vm121, %v2007, 0
  %2010 = vmatpush.msra.mxu0 0.0
  %2011 = vmatpush.msra.mxu0 0.0
  %2012 = vmatpush.msra.mxu0 0.0
  %2013 = vmatpush.msra.mxu0 0.0
  %2014 = vmatpush.msra.mxu0 0.0
  %2015 = vmatpush.msra.mxu0 0.0
  %2016 = vmatpush.msra.mxu0 0.0
  %2017 = vmatpush.msra.mxu0 0.0
  %2018 = vmatpush.msra.mxu0 0.0
  %2019 = vmatpush.msra.mxu0 0.0
  %2020 = vmatpush.msra.mxu0 0.0
  %2021 = vmatpush.msra.mxu0 0.0
  %2022 = vmatpush.msra.mxu0 0.0
  %2023 = vmatpush.msra.mxu0 0.0
  %2024 = vmatpush.msra.mxu0 %v1133
  %2025 = vmatpush.msra.mxu0 %v1132
  %2026 = vmatmul.f32.gmra.mxu0 %v2008
  %v2027 = vpop.f32.mrf.mxu0
  %v2028 = vadd.f32 %v1219, %v2027
  %2029 = vdwg.mxu0
  %v2031 = vrot.slane %v2028, 1
  %v2032 = vrot.slane %v2028, 2
  %v2035 = vadd.f32 %v1213, %v2031
  %v2036 = vadd.f32 %v1216, %v2032
  %v2037 = vxor.u32 %v2035, 2147483648
  %v2038 = vxor.u32 %v2036, 2147483648
  %v2039 = vmul.f32 %v2037, 1.442695
  %v2040 = vpow.pop %v2039
  %v2041 = vmul.f32 %v2038, 1.442695
  %v2042 = vpow.pop %v2041
  %v2043 = vadd.f32 %v2040, 1.0
  %v2044 = vadd.f32 %v2042, 1.0
  %v2045 = vrcp.pop %v2043
  %v2046 = vmul.f32 %v2043, %v2045
  %v2047 = vsub.f32 1.0, %v2046
  %v2048 = vmul.f32 %v2045, %v2047
  %v2049 = vadd.f32 %v2045, %v2048
  %vm2050 = vweird.f32 %v2043
  %vm2051 = vweird.f32 %v2045
  %vm2052 = vmor %vm2050, %vm2051
  %v2053 = vsel %vm2052, %v2045, %v2049
  %v2054 = vand.u32 2147483647, %v2043
  %vm2055 = vcmp.eq.f32.partialorder %v2054, 8.507059e+37
  %v2056 = vand.u32 %v2043, 2147483648
  %v2057 = vor.u32 1.1754944e-38, %v2056
  %v2058 = vsel %vm2055, %v2057, %v2053
  %v2059 = vmul.f32 1.0, %v2058
  %v2060 = vrcp.pop %v2044
  %v2061 = vmul.f32 %v2044, %v2060
  %v2062 = vsub.f32 1.0, %v2061
  %v2063 = vmul.f32 %v2060, %v2062
  %v2064 = vadd.f32 %v2060, %v2063
  %vm2065 = vweird.f32 %v2044
  %vm2066 = vweird.f32 %v2060
  %vm2067 = vmor %vm2065, %vm2066
  %v2068 = vsel %vm2067, %v2060, %v2064
  %v2069 = vand.u32 2147483647, %v2044
  %vm2070 = vcmp.eq.f32.partialorder %v2069, 8.507059e+37
  %v2071 = vand.u32 %v2044, 2147483648
  %v2072 = vor.u32 1.1754944e-38, %v2071
  %v2073 = vsel %vm2070, %v2072, %v2068
  %v2074 = vmul.f32 1.0, %v2073
  %2075 = vrot.lane.b32.xlu0 %v2031, 96
  %v2076 = vpop.permute.xlu0 %2075
  %2077 = vrot.lane.b32.xlu0 %v2032, 96
  %v2078 = vpop.permute.xlu0 %2077
  %v2081 = vmul.f32 %v2059, %v2076
  %v2082 = vmul.f32 %v2074, %v2078
  %2085 = vrot.lane.b32.xlu0 %v2081, 32
  %v2086 = vpop.permute.xlu0 %2085
  %2087 = vrot.lane.b32.xlu0 %v2082, 32
  %v2088 = vpop.permute.xlu0 %2087
  %v2091 = vadd.f32 %v1213, %v2086
  %v2092 = vadd.f32 %v1216, %v2088
  %v2093 = vtanh.pop %v2091
  %v2094 = vtanh.pop %v2092
  %v2095 = vsub.f32 1.0, %v2059
  %v2096 = vsub.f32 1.0, %v2074
  %2099 = vrot.lane.b32.xlu0 %v2093, 112
  %v2100 = vpop.permute.xlu0 %2099
  %2101 = vrot.lane.b32.xlu0 %v2094, 112
  %v2102 = vpop.permute.xlu0 %2101
  %v2105 = vmul.f32 %v2095, %v2100
  %v2106 = vmul.f32 %v2096, %v2102
  %v2107 = vrot.slane %v1999, 7
  %v2108 = vrot.slane %v2000, 7
  %v2111 = vmul.f32 %v2059, %v2107
  %v2112 = vmul.f32 %v2074, %v2108
  %v2113 = vadd.f32 %v2105, %v2111
  %v2114 = vadd.f32 %v2106, %v2112
  %v2115 = vsel %vm1052, %v1319, %v1430
  %v2116 = vsel %vm1052, %v1320, %v1431
  %v2117 = vsel %vm1055, %v2115, %v1543
  %v2118 = vsel %vm1055, %v2116, %v1544
  %v2119 = vsel %vm1058, %v2117, %v1657
  %v2120 = vsel %vm1058, %v2118, %v1658
  %v2121 = vsel %vm1061, %v2119, %v1771
  %v2122 = vsel %vm1061, %v2120, %v1772
  %v2123 = vsel %vm1064, %v2121, %v1885
  %v2124 = vsel %vm1064, %v2122, %v1886
  %v2125 = vsel %vm1067, %v2123, %v1999
  %v2126 = vsel %vm1067, %v2124, %v2000
  %v2127 = vsel %vm1070, %v2125, %v2113
  %v2128 = vsel %vm1070, %v2126, %v2114
  %v2129 = vmul.f32 %v2127, %v40
  %v2130 = vmul.f32 %v2128, %v47
  %2133 = vrot.lane.b32.xlu0 %v2129, 112
  %v2134 = vpop.permute.xlu0 %2133
  %2135 = vrot.lane.b32.xlu0 %v2130, 112
  %v2136 = vpop.permute.xlu0 %2135
  %s2139 = scalar_lea.vmem %s8, 16
  %2140 = vst.msk [vmem:[%s2139] sm:$0xff] %vm121, %v2134
  %2141 = vst.msk [vmem:[%s2139 + $0x8] sm:$0xff] %vm121, %v2136
  %2142 = vrot.lane.b32.xlu0 %v1184, 16
  %v2143 = vpop.permute.xlu0 %2142
  %2144 = vrot.lane.b32.xlu0 %v1185, 16
  %v2145 = vpop.permute.xlu0 %2144
  %v2148 = vmul.f32 %v2129, %v2143
  %v2149 = vmul.f32 %v2130, %v2145
  %2152 = vrot.lane.b32.xlu0 %v2148, 112
  %v2153 = vpop.permute.xlu0 %2152
  %2154 = vrot.lane.b32.xlu0 %v2149, 112
  %v2155 = vpop.permute.xlu0 %2154
  %v2158 = vsel %vm121, %v2153, 0.0
  %2159 = vadd.xlane.f32.xlu0 %v2158
  %v2160 = vpop.xlane.xlu0 %2159
  %v2161 = vsel %vm121, %v2155, 0.0
  %2162 = vadd.xlane.f32.xlu0 %v2161
  %v2163 = vpop.xlane.xlu0 %2162
  %v2166 = vperm.slane %v2160, %v1110
  %v2167 = vperm.slane %v2163, %v1110
  %v2168 = vsel %vm260, %v2167, %v2166
  %s2170 = scalar_lea.vmem %s9, 2
  %2171 = vst.msk [vmem:[%s2170] sm:$0x3] %vm1115, %v2168
  // Predicated region
  $region34: #{cmla_forward.1} parent=0 // pred_check
    _
  $region35: #{cmla_forward.1} parent=0 // pred_check_branch
    %2173 = sbr.rel (0) target = $region37
  $region36: #{cmla_forward.1} parent=0 // pred_region
    _
  $region37: #{cmla_forward.1} parent=0 // pred_fallthru
    _
  // Predicated region
  $region38: #{cmla_forward.1} parent=0 // pred_check
    _
  $region39: #{cmla_forward.1} parent=0 // pred_check_branch
    %2175 = sbr.rel (0) target = $region41
  $region40: #{cmla_forward.1} parent=0 // pred_region
    _
  $region41: #{cmla_forward.1} parent=0 // pred_fallthru
    _
  // Predicated region
  $region42: #{cmla_forward.1} parent=0 // pred_check
    _
  $region43: #{cmla_forward.1} parent=0 // pred_check_branch
    %2177 = sbr.rel (0) target = $region45
  $region44: #{cmla_forward.1} parent=0 // pred_region
    _
  $region45: #{cmla_forward.1} parent=0 // pred_fallthru
    _
  // Predicated region
  $region46: #{cmla_forward.1} parent=0 // pred_check
    _
  $region47: #{cmla_forward.1} parent=0 // pred_check_branch
    %2179 = sbr.rel (0) target = $region49
  $region48: #{cmla_forward.1} parent=0 // pred_region
    _
  $region49: #{cmla_forward.1} parent=0 // pred_fallthru
    _

</llo_original>
